<compile_context>
chip_gen: v6e
topology: v6e:2x2x1
jax: 0.10.0
libtpu: 0.0.40
codegen_flags: <defaults>
</compile_context>

<pallas_src>
import jax
import jax.numpy as jnp
from jax import lax
from jax.experimental import pallas as pl
from jax.experimental.pallas import tpu as pltpu


def _round_up(x, m):
    return ((x + m - 1) // m) * m


def _pick_tile(dim, target):
    """Largest of (target, 512, 256, 128) dividing dim, else dim itself."""
    if dim <= target:
        return dim
    for t in (target, 512, 256, 128):
        if dim % t == 0:
            return t
    return dim


def _vmem_limit_bytes():
    """Generation-dependent VMEM limit: ~3/4 of physical, clamped to [32, 96] MiB."""
    cap = 64 * 1024 * 1024
    try:
        cap = int(getattr(pltpu.get_tpu_info(), "vmem_capacity_bytes", cap))
    except Exception:
        pass
    return max(32 * 1024 * 1024, min(cap * 3 // 4, 96 * 1024 * 1024))


VMEM_LIMIT = _vmem_limit_bytes()


# --------------------------------------------------------------------------
# Fused conv-stem matmul + BN(eval) + ReLU + global-avg-pool.
#   patches: (BTp, P, Kp) bf16, w: (Kp, Np) bf16  ->  pooled (BTp, Np) f32
# Spatial axis P is tiled on an "arbitrary" reduction axis with a partial-sum
# accumulator, so per-block VMEM stays bounded at realistic image sizes.
# --------------------------------------------------------------------------
def _make_conv_gap_kernel(p_total):
    inv_p = 1.0 / float(p_total)

    def kernel(p_ref, w_ref, b_ref, s_ref, t_ref, o_ref, acc_ref):
        j = pl.program_id(1)

        @pl.when(j == 0)
        def _():
            acc_ref[...] = jnp.zeros_like(acc_ref)

        G, TP, Kp = p_ref.shape
        Np = w_ref.shape[1]
        x = p_ref[...].reshape(G * TP, Kp).astype(jnp.bfloat16)
        z = jnp.dot(x, w_ref[...], preferred_element_type=jnp.float32)
        z = (z + b_ref[...]) * s_ref[...] + t_ref[...]      # conv bias + BN(eval)
        z = jnp.maximum(z, 0.0)
        acc_ref[...] += jnp.sum(z.reshape(G, TP, Np), axis=1)

        @pl.when(j == pl.num_programs(1) - 1)
        def _():
            o_ref[...] = acc_ref[...] * inv_p               # mean over spatial P

    return kernel


def _pick_p_tile(P, group, Kp, budget_bytes=4 << 20):
    """Largest spatial tile (divisor of P) keeping the bf16 patch block small."""
    if group * P * Kp * 2 <= budget_bytes:
        return P
    cap = max(8, budget_bytes // (group * Kp * 2))
    for tp in range(cap - cap % 8, 0, -8):
        if P % tp == 0:
            return tp
    return P    # TODO(synk): non-factorable P; falls back to the full spatial block


def pallas_conv_gap(pm, w, b, scale, shift, group=8):
    BTp, P, Kp = pm.shape
    Np = w.shape[1]
    assert BTp % group == 0
    tp = _pick_p_tile(P, group, Kp)
    return pl.pallas_call(
        _make_conv_gap_kernel(P),
        out_shape=jax.ShapeDtypeStruct((BTp, Np), jnp.float32),
        grid=(BTp // group, P // tp),
        in_specs=[pl.BlockSpec((group, tp, Kp), lambda i, j: (i, j, 0)),
                  pl.BlockSpec((Kp, Np), lambda i, j: (0, 0)),
                  pl.BlockSpec((1, Np), lambda i, j: (0, 0)),
                  pl.BlockSpec((1, Np), lambda i, j: (0, 0)),
                  pl.BlockSpec((1, Np), lambda i, j: (0, 0))],
        out_specs=pl.BlockSpec((group, Np), lambda i, j: (i, 0)),
        scratch_shapes=[pltpu.VMEM((group, Np), jnp.float32)],
        compiler_params=pltpu.CompilerParams(
            dimension_semantics=("parallel", "arbitrary"),
            vmem_limit_bytes=VMEM_LIMIT),
    )(pm, w, b.reshape(1, Np), scale.reshape(1, Np), shift.reshape(1, Np))


# --------------------------------------------------------------------------
# Fused small-M linear chain:
#   feat  = pooled @ W_res + b_res                      (resnet stand-in fc)
#   z     = relu(feat @ W_mlp_feat + y @ W_mlp_y + b)   (label_mlp1 on cat(feat,Y))
#   xproj = z @ W_ih^T + (b_ih + b_hh)                  (LSTM input projection)
# One pallas_call, weights resident in VMEM, grid only over row groups.
# --------------------------------------------------------------------------
def _stem_proj_kernel(pool_ref, y_ref, rw_ref, rb_ref, wf_ref, wy_ref, mb_ref,
                      wih_ref, lb_ref, feat_ref, xp_ref):
    feat = jnp.dot(pool_ref[...].astype(jnp.bfloat16), rw_ref[...],
                   preferred_element_type=jnp.float32) + rb_ref[...]
    feat_ref[...] = feat
    z = (jnp.dot(feat.astype(jnp.bfloat16), wf_ref[...],
                 preferred_element_type=jnp.float32)
         + jnp.dot(y_ref[...].astype(jnp.bfloat16), wy_ref[...],
                   preferred_element_type=jnp.float32)
         + mb_ref[...])
    z = jnp.maximum(z, 0.0)
    xp_ref[...] = jnp.dot(z.astype(jnp.bfloat16), wih_ref[...],
                          preferred_element_type=jnp.float32) + lb_ref[...]


def pallas_stem_proj(pooled, y, rw, rb, wf, wy, mb, wih, lb, group=8):
    BTp, Cp = pooled.shape
    Yp = y.shape[1]
    Dp = rw.shape[1]
    Hp = wf.shape[1]
    H4 = wih.shape[1]
    assert BTp % group == 0
    return pl.pallas_call(
        _stem_proj_kernel,
        out_shape=(jax.ShapeDtypeStruct((BTp, Dp), jnp.float32),
                   jax.ShapeDtypeStruct((BTp, H4), jnp.float32)),
        grid=(BTp // group,),
        in_specs=[pl.BlockSpec((group, Cp), lambda i: (i, 0)),
                  pl.BlockSpec((group, Yp), lambda i: (i, 0)),
                  pl.BlockSpec((Cp, Dp), lambda i: (0, 0)),
                  pl.BlockSpec((1, Dp), lambda i: (0, 0)),
                  pl.BlockSpec((Dp, Hp), lambda i: (0, 0)),
                  pl.BlockSpec((Yp, Hp), lambda i: (0, 0)),
                  pl.BlockSpec((1, Hp), lambda i: (0, 0)),
                  pl.BlockSpec((Hp, H4), lambda i: (0, 0)),
                  pl.BlockSpec((1, H4), lambda i: (0, 0))],
        out_specs=(pl.BlockSpec((group, Dp), lambda i: (i, 0)),
                   pl.BlockSpec((group, H4), lambda i: (i, 0))),
        compiler_params=pltpu.CompilerParams(
            dimension_semantics=("parallel",),
            vmem_limit_bytes=VMEM_LIMIT),
    )(pooled, y, rw, rb.reshape(1, Dp), wf, wy, mb.reshape(1, Hp),
      wih, lb.reshape(1, H4))


# --------------------------------------------------------------------------
# LSTM recurrence (gate order i, f, g, o — matches nn.LSTM), returns final h.
#   xproj: (T, Bp, 4Hp) f32 precomputed x_t @ W_ih^T + (b_ih + b_hh), resident.
#   whh_t: (Hp, 4Hp) bf16 (W_hh^T), loaded once (single grid step).
# Single grid step + in-kernel fori_loop: no per-timestep pipeline overhead.
# Elementwise gate update is chunked over 512-lane slices (bounds live vregs).
# --------------------------------------------------------------------------
def _lstm_kernel(xp_ref, whh_ref, o_ref, h_ref, c_ref):
    T, Bp, H4 = xp_ref.shape
    Hp = H4 // 4
    CH = min(Hp, 512)
    h_ref[...] = jnp.zeros_like(h_ref)          # None initial state -> zeros
    c_ref[...] = jnp.zeros_like(c_ref)

    def step(t, carry):
        gates = xp_ref[t] + jnp.dot(h_ref[...].astype(jnp.bfloat16), whh_ref[...],
                                    preferred_element_type=jnp.float32)
        for j in range(0, Hp, CH):
            i_g = jax.nn.sigmoid(gates[:, 0 * Hp + j:0 * Hp + j + CH])
            f_g = jax.nn.sigmoid(gates[:, 1 * Hp + j:1 * Hp + j + CH])
            g_g = jnp.tanh(gates[:, 2 * Hp + j:2 * Hp + j + CH])
            o_g = jax.nn.sigmoid(gates[:, 3 * Hp + j:3 * Hp + j + CH])
            c_new = f_g * c_ref[:, j:j + CH] + i_g * g_g
            c_ref[:, j:j + CH] = c_new
            h_ref[:, j:j + CH] = o_g * jnp.tanh(c_new)
        return carry

    lax.fori_loop(0, T, step, 0)
    o_ref[...] = h_ref[...]                     # final h of the last timestep


def pallas_lstm(xproj, whh_t):
    T, Bp, H4 = xproj.shape
    Hp = H4 // 4
    return pl.pallas_call(
        _lstm_kernel,
        out_shape=jax.ShapeDtypeStruct((Bp, Hp), jnp.float32),
        grid=(1,),
        in_specs=[pl.BlockSpec((T, Bp, H4), lambda i: (0, 0, 0)),
                  pl.BlockSpec((Hp, H4), lambda i: (0, 0))],
        out_specs=pl.BlockSpec((Bp, Hp), lambda i: (0, 0)),
        scratch_shapes=[pltpu.VMEM((Bp, Hp), jnp.float32),
                        pltpu.VMEM((Bp, Hp), jnp.float32)],
        compiler_params=pltpu.CompilerParams(
            dimension_semantics=("arbitrary",),
            vmem_limit_bytes=VMEM_LIMIT),
    )(xproj, whh_t)


# --------------------------------------------------------------------------
# Fused head: fc1 -> ReLU -> fc2 -> ReLU -> fc3 in one call.
# fc1's big weight is streamed/accumulated over K in two 1536-wide blocks.
# --------------------------------------------------------------------------
def _head_kernel(x_ref, w1_ref, b1_ref, w2_ref, b2_ref, w3_ref, b3_ref,
                 o_ref, acc_ref):
    k = pl.program_id(0)

    @pl.when(k == 0)
    def _():
        acc_ref[...] = jnp.zeros_like(acc_ref)

    acc_ref[...] += jnp.dot(x_ref[...].astype(jnp.bfloat16), w1_ref[...],
                            preferred_element_type=jnp.float32)

    @pl.when(k == pl.num_programs(0) - 1)
    def _():
        h1 = jnp.maximum(acc_ref[...] + b1_ref[...], 0.0)
        h2 = jnp.dot(h1.astype(jnp.bfloat16), w2_ref[...],
                     preferred_element_type=jnp.float32) + b2_ref[...]
        h2 = jnp.maximum(h2, 0.0)
        o_ref[...] = jnp.dot(h2.astype(jnp.bfloat16), w3_ref[...],
                             preferred_element_type=jnp.float32) + b3_ref[...]


def pallas_head(x, w1, b1, w2, b2, w3, b3):
    Bp, K1 = x.shape
    N1, N2, N3 = w1.shape[1], w2.shape[1], w3.shape[1]
    tk = _pick_tile(K1, 1536)
    return pl.pallas_call(
        _head_kernel,
        out_shape=jax.ShapeDtypeStruct((Bp, N3), jnp.float32),
        grid=(K1 // tk,),
        in_specs=[pl.BlockSpec((Bp, tk), lambda k: (0, k)),
                  pl.BlockSpec((tk, N1), lambda k: (k, 0)),
                  pl.BlockSpec((1, N1), lambda k: (0, 0)),
                  pl.BlockSpec((N1, N2), lambda k: (0, 0)),
                  pl.BlockSpec((1, N2), lambda k: (0, 0)),
                  pl.BlockSpec((N2, N3), lambda k: (0, 0)),
                  pl.BlockSpec((1, N3), lambda k: (0, 0))],
        out_specs=pl.BlockSpec((Bp, N3), lambda k: (0, 0)),
        scratch_shapes=[pltpu.VMEM((Bp, N1), jnp.float32)],
        compiler_params=pltpu.CompilerParams(
            dimension_semantics=("arbitrary",),
            vmem_limit_bytes=VMEM_LIMIT),
    )(x, w1, b1.reshape(1, N1), w2, b2.reshape(1, N2), w3, b3.reshape(1, N3))


# --------------------------------------------------------------------------
# Glue: im2col for the conv stem (patch extraction; the matmul is in Pallas).
# TODO(synk): at real (224x224) image sizes the patch tensor should be built
# by manual DMA inside the conv kernel instead of materialized in HBM.
# --------------------------------------------------------------------------
def im2col(x, kh, kw, stride, pad):
    # x: (N, C, H, W) NCHW -> (N, OH, OW, C*kh*kw), feature order (C, kh, kw)
    N, C, H, W = x.shape
    xp = jnp.pad(x, ((0, 0), (0, 0), (pad, pad), (pad, pad)))
    oh = (H + 2 * pad - kh) // stride + 1
    ow = (W + 2 * pad - kw) // stride + 1
    cols = []
    for i in range(kh):
        for j in range(kw):
            cols.append(xp[:, :, i:i + stride * oh:stride, j:j + stride * ow:stride])
    p = jnp.stack(cols, axis=2)                                # (N, C, kh*kw, OH, OW)
    p = p.transpose(0, 3, 4, 1, 2).reshape(N, oh, ow, C * kh * kw)
    return p, oh, ow


# --------------------------------------------------------------------------
# Deterministic parameter init (shapes from KinematicLSTMv1.__init__ defaults),
# zero-padded to 128-lane multiples, weights stored bf16.
# --------------------------------------------------------------------------
def init_params(key, lstm_hidden_dim=1000, h_fc_dim=1000, n_output=8):
    D = 1000                                 # lstm_input_dim = resnet18 output dim
    H = lstm_hidden_dim
    Dp, Hp, Fp = _round_up(D, 128), _round_up(H, 128), _round_up(h_fc_dim, 128)
    Op = _round_up(n_output, 128)
    Yp = _round_up(n_output, 128)            # padded Y_in lane width
    STEM_C, Cp = 64, 128
    KC = 3 * 7 * 7
    # TODO(synk): K=147 is padded to 256 (~43% zero padding of the conv-stem
    # contraction); a full-dim K block would remove it but is riskier to lower.
    KCp = _round_up(KC, 128)

    ks = iter(jax.random.split(key, 64))

    def uniform(shape, bound):
        return jax.random.uniform(next(ks), shape, jnp.float32, -bound, bound)

    def padded_linear(fan_in, fan_out, in_pad, out_pad):
        bound = fan_in ** -0.5
        w = jnp.zeros((in_pad, out_pad), jnp.float32)
        w = w.at[:fan_in, :fan_out].set(uniform((fan_in, fan_out), bound))
        b = jnp.zeros((out_pad,), jnp.float32)
        b = b.at[:fan_out].set(uniform((fan_out,), bound))
        return w.astype(jnp.bfloat16), b

    p = {"dims": dict(D=D, H=H, Dp=Dp, Hp=Hp, Op=Op, Yp=Yp,
                      n_output=n_output, KC=KC, KCp=KCp, Cp=Cp)}

    # ResNet-18 stand-in: stem conv(7x7/2, 3->64) + BN + ReLU + GAP + fc(64->1000)
    # TODO(synk): maxpool + the 4 residual stages of torchvision resnet18 are omitted.
    cw = jnp.zeros((KCp, Cp), jnp.float32)
    cw = cw.at[:KC, :STEM_C].set(uniform((KC, STEM_C), KC ** -0.5))
    p["conv_w"] = cw.astype(jnp.bfloat16)
    p["conv_b"] = jnp.zeros((Cp,), jnp.float32)
    eps = 1e-5                                # BN eval: gamma=1, beta=0, mean=0, var=1
    p["conv_bn"] = (jnp.full((Cp,), 1.0 / jnp.sqrt(1.0 + eps), jnp.float32),
                    jnp.zeros((Cp,), jnp.float32))
    p["res_fc"] = padded_linear(STEM_C, D, Cp, Dp)

    # label_mlp1: Linear(D+8, H), split into a feature part and a Y part so the
    # concat never has to be materialized in the fused stem/proj kernel.
    bound = (D + n_output) ** -0.5
    wf = jnp.zeros((Dp, Hp), jnp.float32)
    wf = wf.at[:D, :H].set(uniform((D, H), bound))
    wy = jnp.zeros((Yp, Hp), jnp.float32)
    wy = wy.at[:n_output, :H].set(uniform((n_output, H), bound))
    mb = jnp.zeros((Hp,), jnp.float32).at[:H].set(uniform((H,), bound))
    p["mlp1_wf"] = wf.astype(jnp.bfloat16)
    p["mlp1_wy"] = wy.astype(jnp.bfloat16)
    p["mlp1_b"] = mb

    # LSTM: weight_ih (4H, D), weight_hh (4H, H), gate order i, f, g, o.
    bound = H ** -0.5
    w_ih_t = jnp.zeros((Hp, 4 * Hp), jnp.float32)        # (input_dim_pad, 4Hp)
    w_hh_t = jnp.zeros((Hp, 4 * Hp), jnp.float32)
    b_l = jnp.zeros((4 * Hp,), jnp.float32)
    for g in range(4):
        w_ih_t = w_ih_t.at[:D, g * Hp:g * Hp + H].set(uniform((D, H), bound))
        w_hh_t = w_hh_t.at[:H, g * Hp:g * Hp + H].set(uniform((H, H), bound))
        b_l = b_l.at[g * Hp:g * Hp + H].set(uniform((H,), bound)
                                            + uniform((H,), bound))   # b_ih + b_hh
    p["w_ih_t"] = w_ih_t.astype(jnp.bfloat16)
    p["w_hh_t"] = w_hh_t.astype(jnp.bfloat16)
    p["lstm_b"] = b_l

    # fc1: Linear(3H, h_fc_dim); padded input layout [h(Hp) | q0(Dp) | q1(Dp)]
    bound = (3 * H) ** -0.5
    w1 = jnp.zeros((Hp + 2 * Dp, Fp), jnp.float32)
    w1 = w1.at[:H, :h_fc_dim].set(uniform((H, h_fc_dim), bound))
    w1 = w1.at[Hp:Hp + D, :h_fc_dim].set(uniform((D, h_fc_dim), bound))
    w1 = w1.at[Hp + Dp:Hp + Dp + D, :h_fc_dim].set(uniform((D, h_fc_dim), bound))
    b1 = jnp.zeros((Fp,), jnp.float32).at[:h_fc_dim].set(uniform((h_fc_dim,), bound))
    p["fc1"] = (w1.astype(jnp.bfloat16), b1)
    p["fc2"] = padded_linear(h_fc_dim, 256, Fp, 256)
    p["fc3"] = padded_linear(256, n_output, 256, Op)
    return p


# --------------------------------------------------------------------------
# Forward pass (inference): matches KinematicLSTMv1.forward
# --------------------------------------------------------------------------
def kinematic_lstm_forward(params, x_3d, y_in):
    d = params["dims"]
    Dp, Hp, Yp = d["Dp"], d["Hp"], d["Yp"]
    n_out, KCp = d["n_output"], d["KCp"]
    B, T, C, Himg, Wimg = x_3d.shape
    Tc = T - 2
    BT = B * T
    GROUP = 8
    BTp = _round_up(BT, GROUP)
    Bp = _round_up(B, 8)            # pad batch to 8 rows inside LSTM / head

    # ---- per-frame CNN feature extractor (resnet18 stand-in) ----------------
    frames = x_3d.reshape(BT, C, Himg, Wimg)
    patches, oh, ow = im2col(frames, 7, 7, stride=2, pad=3)
    P, K = oh * ow, C * 49
    pm = jnp.pad(patches.reshape(BT, P, K).astype(jnp.bfloat16),   # bf16 stream
                 ((0, BTp - BT), (0, 0), (0, KCp - K)))
    pooled = pallas_conv_gap(pm, params["conv_w"], params["conv_b"],
                             *params["conv_bn"], group=GROUP)      # (BTp, 128)

    # Y_in broadcast to every frame row (zeros on query frames; their xproj is
    # computed but unused, which is cheaper than a second kernel launch).
    y_bt = jnp.zeros((B, T, Yp), jnp.float32)
    y_bt = y_bt.at[:, :Tc, :n_out].set(y_in.astype(jnp.float32))
    y_bt = jnp.pad(y_bt.reshape(BT, Yp), ((0, BTp - BT), (0, 0)))  # (BTp, Yp)

    # ---- fused res_fc -> label_mlp1(+ReLU) -> LSTM input projection ---------
    # F.dropout(p=0.5) on the CNN embedding: inference mode -> identity.
    feat_all, xproj_all = pallas_stem_proj(
        pooled, y_bt, *params["res_fc"],
        params["mlp1_wf"], params["mlp1_wy"], params["mlp1_b"],
        params["w_ih_t"], params["lstm_b"], group=GROUP)
    feat = feat_all[:BT].reshape(B, T, Dp)                         # (B, T, Dp)
    qry = feat[:, Tc:, :]                                          # (B, 2, Dp)

    # ---- LSTM (batch_first, zero init state); only the final h is needed ----
    xproj = xproj_all[:BT].reshape(B, T, 4 * Hp)[:, :Tc, :]        # context rows
    xproj = jnp.pad(xproj.transpose(1, 0, 2), ((0, 0), (0, Bp - B), (0, 0)))
    h_last = pallas_lstm(xproj, params["w_hh_t"])                  # (Bp, Hp)

    # ---- head: cat(h_last, query) -> fc1 -> ReLU -> fc2 -> ReLU -> fc3 ------
    x_head = jnp.concatenate([h_last[:B], qry[:, 0, :], qry[:, 1, :]], axis=-1)
    x_head = jnp.pad(x_head, ((0, Bp - B), (0, 0)))                # (Bp, Hp+2Dp)
    out = pallas_head(x_head, *params["fc1"], *params["fc2"], *params["fc3"])
    return out[:B, :n_out]                                         # (B, n_output)


if __name__ == "__main__":
    key = jax.random.PRNGKey(0)
    k_param, k_x, k_y = jax.random.split(key, 3)

    B, T, C, Himg, Wimg = 2, 6, 3, 16, 16      # T-2 = 4 context frames, 2 query frames
    n_output = 8
    x_3d = jax.random.normal(k_x, (B, T, C, Himg, Wimg), jnp.float32)
    y_in = jax.random.normal(k_y, (B, T - 2, n_output), jnp.float32)

    params = init_params(k_param, lstm_hidden_dim=1000, h_fc_dim=1000,
                         n_output=n_output)

    out = kinematic_lstm_forward(params, x_3d, y_in)
    out = jax.block_until_ready(out)

    assert out.shape == (B, n_output), out.shape
    assert bool(jnp.all(jnp.isfinite(out)))
    print("KERNEL_OK")
</pallas_src>

<mosaic_0001>
module attributes {stable_mosaic.version = 11 : i64} {
  func.func @kernel(%arg0: i32, %arg1: i32, %arg2: memref<8x64x256xbf16, #tpu.memory_space<vmem>>, %arg3: memref<256x128xbf16, #tpu.memory_space<vmem>>, %arg4: memref<1x128xf32, #tpu.memory_space<vmem>>, %arg5: memref<1x128xf32, #tpu.memory_space<vmem>>, %arg6: memref<1x128xf32, #tpu.memory_space<vmem>>, %arg7: memref<8x128xf32, #tpu.memory_space<vmem>>, %arg8: memref<8x128xf32, #tpu.memory_space<vmem>>) attributes {dimension_semantics = [#tpu.dimension_semantics<parallel>, #tpu.dimension_semantics<arbitrary>], iteration_bounds = array<i64: 2, 1>, scalar_prefetch = 0 : i64, scratch_operands = 1 : i64, tpu.core_type = #tpu.core_type<tc>, window_params = [{transform_indices = @transform_0, window_bounds = array<i64: 8, 64, 256>}, {pipeline_mode = #tpu.pipeline_mode<synchronous>, transform_indices = @transform_1, window_bounds = array<i64: 256, 128>}, {pipeline_mode = #tpu.pipeline_mode<synchronous>, transform_indices = @transform_2, window_bounds = array<i64: 1, 128>}, {pipeline_mode = #tpu.pipeline_mode<synchronous>, transform_indices = @transform_3, window_bounds = array<i64: 1, 128>}, {pipeline_mode = #tpu.pipeline_mode<synchronous>, transform_indices = @transform_4, window_bounds = array<i64: 1, 128>}, {transform_indices = @transform_5, window_bounds = array<i64: 8, 128>}]} {
    %c0_i32 = arith.constant 0 : i32
    %0 = arith.cmpi eq, %arg1, %c0_i32 : i32
    %1 = arith.extui %0 : i1 to i32
    %c0_i32_0 = arith.constant 0 : i32
    %2 = arith.cmpi ne, %1, %c0_i32_0 : i32
    scf.if %2 {
      %cst_19 = arith.constant 0.000000e+00 : f32
      %26 = vector.broadcast %cst_19 : f32 to vector<8x128xf32>
      %c0_20 = arith.constant 0 : index
      %c0_21 = arith.constant 0 : index
      %27 = vector.load %arg8[%c0_20, %c0_21] : memref<8x128xf32, #tpu.memory_space<vmem>>, vector<8x128xf32>
      tpu.vector_store %arg8[%c0_20, %c0_21], %26 {strides = array<i32>} : memref<8x128xf32, #tpu.memory_space<vmem>>, vector<8x128xf32>,
    } else {
    }
    %c0 = arith.constant 0 : index
    %c0_1 = arith.constant 0 : index
    %c0_2 = arith.constant 0 : index
    %3 = vector.load %arg2[%c0, %c0_1, %c0_2] : memref<8x64x256xbf16, #tpu.memory_space<vmem>>, vector<8x64x256xbf16>
    %4 = vector.shape_cast %3 : vector<8x64x256xbf16> to vector<512x256xbf16>
    %c0_3 = arith.constant 0 : index
    %c0_4 = arith.constant 0 : index
    %5 = vector.load %arg3[%c0_3, %c0_4] : memref<256x128xbf16, #tpu.memory_space<vmem>>, vector<256x128xbf16>
    %cst = arith.constant dense<0.000000e+00> : vector<512x128xf32>
    %6 = tpu.matmul %4, %5, %cst {dimension_numbers = #tpu.dot_dimension_numbers<[1], [0], [0], [1], [0, 0, 1, 1], [], []>} : vector<512x256xbf16>, vector<256x128xbf16>, vector<512x128xf32> -> vector<512x128xf32>
    %c0_5 = arith.constant 0 : index
    %c0_6 = arith.constant 0 : index
    %7 = vector.load %arg4[%c0_5, %c0_6] : memref<1x128xf32, #tpu.memory_space<vmem>>, vector<1x128xf32>
    %8 = vector.broadcast %7 : vector<1x128xf32> to vector<512x128xf32>
    %9 = arith.addf %6, %8 : vector<512x128xf32>
    %c0_7 = arith.constant 0 : index
    %c0_8 = arith.constant 0 : index
    %10 = vector.load %arg5[%c0_7, %c0_8] : memref<1x128xf32, #tpu.memory_space<vmem>>, vector<1x128xf32>
    %11 = vector.broadcast %10 : vector<1x128xf32> to vector<512x128xf32>
    %12 = arith.mulf %9, %11 : vector<512x128xf32>
    %c0_9 = arith.constant 0 : index
    %c0_10 = arith.constant 0 : index
    %13 = vector.load %arg6[%c0_9, %c0_10] : memref<1x128xf32, #tpu.memory_space<vmem>>, vector<1x128xf32>
    %14 = vector.broadcast %13 : vector<1x128xf32> to vector<512x128xf32>
    %15 = arith.addf %12, %14 : vector<512x128xf32>
    %cst_11 = arith.constant 0.000000e+00 : f32
    %16 = vector.broadcast %cst_11 : f32 to vector<512x128xf32>
    %17 = arith.maximumf %15, %16 : vector<512x128xf32>
    %c0_12 = arith.constant 0 : index
    %c0_13 = arith.constant 0 : index
    %18 = vector.load %arg8[%c0_12, %c0_13] : memref<8x128xf32, #tpu.memory_space<vmem>>, vector<8x128xf32>
    %19 = vector.shape_cast %17 : vector<512x128xf32> to vector<8x64x128xf32>
    %cst_14 = arith.constant dense<0.000000e+00> : vector<8x128xf32>
    %20 = vector.multi_reduction <add>, %19, %cst_14 [1] : vector<8x64x128xf32> to vector<8x128xf32>
    %21 = arith.addf %18, %20 : vector<8x128xf32>
    %c0_15 = arith.constant 0 : index
    %c0_16 = arith.constant 0 : index
    %22 = vector.load %arg8[%c0_15, %c0_16] : memref<8x128xf32, #tpu.memory_space<vmem>>, vector<8x128xf32>
    tpu.vector_store %arg8[%c0_15, %c0_16], %21 {strides = array<i32>} : memref<8x128xf32, #tpu.memory_space<vmem>>, vector<8x128xf32>,
    %c0_i32_17 = arith.constant 0 : i32
    %23 = arith.cmpi eq, %arg1, %c0_i32_17 : i32
    %24 = arith.extui %23 : i1 to i32
    %c0_i32_18 = arith.constant 0 : i32
    %25 = arith.cmpi ne, %24, %c0_i32_18 : i32
    scf.if %25 {
      %c0_19 = arith.constant 0 : index
      %c0_20 = arith.constant 0 : index
      %26 = vector.load %arg8[%c0_19, %c0_20] : memref<8x128xf32, #tpu.memory_space<vmem>>, vector<8x128xf32>
      %cst_21 = arith.constant 1.562500e-02 : f32
      %27 = vector.broadcast %cst_21 : f32 to vector<8x128xf32>
      %28 = arith.mulf %26, %27 : vector<8x128xf32>
      %c0_22 = arith.constant 0 : index
      %c0_23 = arith.constant 0 : index
      %29 = vector.load %arg7[%c0_22, %c0_23] : memref<8x128xf32, #tpu.memory_space<vmem>>, vector<8x128xf32>
      tpu.vector_store %arg7[%c0_22, %c0_23], %28 {strides = array<i32>} : memref<8x128xf32, #tpu.memory_space<vmem>>, vector<8x128xf32>,
    } else {
    }
    return
  }
  func.func @transform_0(%arg0: i32, %arg1: i32) -> (i32, i32, i32) {
    %c0_i32 = arith.constant 0 : i32
    %c0_i32_0 = arith.constant 0 : i32
    return %arg0, %arg1, %c0_i32 : i32, i32, i32
  }
  func.func @transform_1(%arg0: i32, %arg1: i32) -> (i32, i32) {
    %c0_i32 = arith.constant 0 : i32
    %c0_i32_0 = arith.constant 0 : i32
    %c0_i32_1 = arith.constant 0 : i32
    return %c0_i32, %c0_i32_0 : i32, i32
  }
  func.func @transform_2(%arg0: i32, %arg1: i32) -> (i32, i32) {
    %c0_i32 = arith.constant 0 : i32
    %c0_i32_0 = arith.constant 0 : i32
    %c0_i32_1 = arith.constant 0 : i32
    return %c0_i32, %c0_i32_0 : i32, i32
  }
  func.func @transform_3(%arg0: i32, %arg1: i32) -> (i32, i32) {
    %c0_i32 = arith.constant 0 : i32
    %c0_i32_0 = arith.constant 0 : i32
    %c0_i32_1 = arith.constant 0 : i32
    return %c0_i32, %c0_i32_0 : i32, i32
  }
  func.func @transform_4(%arg0: i32, %arg1: i32) -> (i32, i32) {
    %c0_i32 = arith.constant 0 : i32
    %c0_i32_0 = arith.constant 0 : i32
    %c0_i32_1 = arith.constant 0 : i32
    return %c0_i32, %c0_i32_0 : i32, i32
  }
  func.func @transform_5(%arg0: i32, %arg1: i32) -> (i32, i32) {
    %c0_i32 = arith.constant 0 : i32
    %c0_i32_0 = arith.constant 0 : i32
    return %arg0, %c0_i32 : i32, i32
  }
}

</mosaic_0001>

<llo_original>
// kernel: tpu_custom_call.1
$region0: #{tpu_custom_call.1}
  #allocation0 [shape = 'u32[]', space=smem, size = 0x4, offset = 0x4, fixed_abs, tag = 'smem constant byte address 0x4 - core index']
  #allocation1 [shape = 'u32[144,128]{1,0:T(1,128)}', space=vmem, size = 0x12000, scoped, tag = 'internal scratch']
  #allocation2 [shape = 'f32[8,128]{1,0:T(8,128)}', space=vmem, size = 0x1000, scoped, tag = 'scratch operand']
  %s0 = inlined_call_operand.hbm [shape: bf16[16,64,256], index: 0, kind: input, shape index: {}]
  %s1 = inlined_call_operand.hbm [shape: bf16[256,128], index: 1, kind: input, shape index: {}]
  %s2 = inlined_call_operand.vmem [shape: f32[1,128], index: 2, kind: input, shape index: {}]
  %s3 = inlined_call_operand.vmem [shape: f32[1,128], index: 3, kind: input, shape index: {}]
  %s4 = inlined_call_operand.vmem [shape: f32[1,128], index: 4, kind: input, shape index: {}]
  %s5 = inlined_call_operand.hbm [shape: f32[16,128], index: 5, kind: output, shape index: {}]
  %s6 = sld [smem:[#allocation0]]
  $region69: #{tpu_custom_call.1} parent=0
    _
  %s8 = ssub.s32 1, %s6
  %s9 = scalar_select 0, %s8, %s6
  $region1: #{tpu_custom_call.1} parent=0
    #allocation3 [shape = 'u8[524288]{0}', space=vmem, size = 0x80000, scoped, tag = 'input window, operand 0']
    #allocation4 [shape = 's32[2]{0}', space=sflag, size = 0x8, scoped, tag = 'scoped memory for tpu_custom_call.1']
    #allocation5 [shape = 's32[2]{0}', space=sflag, size = 0x8, scoped, tag = 'scoped memory for tpu_custom_call.1']
    #allocation6 [shape = 'u8[65536]{0}', space=vmem, size = 0x10000, scoped, tag = 'input window, operand 1, single buffered']
    #allocation7 [shape = 's32[1]{0}', space=sflag, size = 0x4, scoped, tag = 'scoped memory for tpu_custom_call.1']
    #allocation8 [shape = 'u8[8192]{0}', space=vmem, size = 0x2000, scoped, tag = 'output window, operand 0']
    %10 = vsyncpa [#allocation4], 0
    %s11 = scalar_lea.sflag [#allocation4], 1
    %12 = vsyncpa %s11, 0
    %13 = vsyncpa [#allocation7], 0
    %14 = vsyncpa [#allocation5], 0
    %s15 = scalar_lea.sflag [#allocation5], 1
    %16 = vsyncpa %s15, 0
    loop: start=0, step=1, limit=4
    $region2: #{tpu_custom_call.1} parent=1 // loop_pre_header
      _
    $region3: #{tpu_custom_call.1} parent=1 // loop_header
      %s18 = sphi 0, %s22
      %p19 = scmp.ge.s32.totalorder %s18, 4
      %s25 = sphi 0, %s37
      %s26 = sphi 0, %s33
      %s27 = sphi 0, %s25
      %s28 = sphi 0, %s26
      %s29 = sphi 0, %s27
      %s30 = sphi 0, %s28
      %s42 = sphi 0, %s44
      %s45 = sphi 0, %s42
      %s46 = sphi 0, %s45
      %s62 = sphi 0, %s46
      %s66 = sphi 0, %s66
      %s68 = sphi 0, %s66
      %s69 = sphi 0, %s68
      %s83 = sphi 0, %s69
      %s87 = sphi 0, %s87
      %s89 = sphi 0, %s87
      %s90 = sphi 0, %s89
      %s104 = sphi 0, %s90
      %s108 = sphi 0, %s108
      %s110 = sphi 0, %s108
      %s111 = sphi 0, %s110
      %s125 = sphi 0, %s111
      %s129 = sphi 0, %s129
      %s131 = sphi 0, %s129
      %s132 = sphi 0, %s131
      %s146 = sphi 0, %s132
      %s152 = sphi 0, %s154
      %s155 = sphi 0, %s152
      %s156 = sphi 0, %s155
      %s172 = sphi 0, %s156
    $region4: #{tpu_custom_call.1} parent=1 // loop_header_branch
      %21 = sbr.rel (%p19) target = $region8
    $region5: #{tpu_custom_call.1} parent=1 // loop_body
      %s23 = ssub.s32 %s18, 1
      %s24 = ssub.s32 %s18, 2
      %s31 = sadd.s32 1, %s26
      %p32 = scmp.ge.s32.totalorder %s31, 1
      %s33 = scalar_select %p32, 0, %s31
      %s34 = sadd.s32 1, %s25
      %s35 = scalar_select %p32, %s34, %s25
      %p36 = scmp.ge.s32.totalorder %s35, 2
      %s37 = scalar_select %p36, 0, %s35
      %s38 = ssub.s32 %s25, %s37
      %s39 = ssub.s32 %s26, %s33
      %s40 = sor.u32 %s38, %s39
      %p41 = scmp.eq.s32.totalorder %s40, 0
      %s43 = sadd.s32 %s42, 1
      %s44 = scalar_select %p41, %s42, %s43
      %p47 = pneg %p41
      %p48 = scmp.eq.s32.totalorder %s18, 1
      %p49 = por %p47, %p48
      %p50 = scmp.ne.s32.totalorder %s42, %s45
      %p51 = scmp.eq.s32.totalorder %s18, 0
      %p52 = por %p50, %p51
      %p53 = scmp.ne.s32.totalorder %s42, %s45
      %p54 = scmp.eq.s32.totalorder %s23, 1
      %p55 = por %p53, %p54
      %p56 = scmp.ne.s32.totalorder %s45, %s46
      %p57 = scmp.eq.s32.totalorder %s23, 0
      %p58 = por %p56, %p57
      %p59 = scmp.ne.s32.totalorder %s45, %s46
      %p60 = scmp.eq.s32.totalorder %s24, 1
      %p61 = por %p59, %p60
      %p63 = scmp.ne.s32.totalorder %s46, %s62
      %p64 = scmp.eq.s32.totalorder %s24, 0
      %p65 = por %p63, %p64
      %s67 = sadd.s32 %s66, 1
      %p70 = scmp.eq.s32.totalorder %s18, 1
      %p71 = scmp.ne.s32.totalorder %s66, %s68
      %p72 = scmp.eq.s32.totalorder %s18, 0
      %p73 = por %p71, %p72
      %p74 = scmp.ne.s32.totalorder %s66, %s68
      %p75 = scmp.eq.s32.totalorder %s23, 1
      %p76 = por %p74, %p75
      %p77 = scmp.ne.s32.totalorder %s68, %s69
      %p78 = scmp.eq.s32.totalorder %s23, 0
      %p79 = por %p77, %p78
      %p80 = scmp.ne.s32.totalorder %s68, %s69
      %p81 = scmp.eq.s32.totalorder %s24, 1
      %p82 = por %p80, %p81
      %p84 = scmp.ne.s32.totalorder %s69, %s83
      %p85 = scmp.eq.s32.totalorder %s24, 0
      %p86 = por %p84, %p85
      %s88 = sadd.s32 %s87, 1
      %p91 = scmp.eq.s32.totalorder %s18, 1
      %p92 = scmp.ne.s32.totalorder %s87, %s89
      %p93 = scmp.eq.s32.totalorder %s18, 0
      %p94 = por %p92, %p93
      %p95 = scmp.ne.s32.totalorder %s87, %s89
      %p96 = scmp.eq.s32.totalorder %s23, 1
      %p97 = por %p95, %p96
      %p98 = scmp.ne.s32.totalorder %s89, %s90
      %p99 = scmp.eq.s32.totalorder %s23, 0
      %p100 = por %p98, %p99
      %p101 = scmp.ne.s32.totalorder %s89, %s90
      %p102 = scmp.eq.s32.totalorder %s24, 1
      %p103 = por %p101, %p102
      %p105 = scmp.ne.s32.totalorder %s90, %s104
      %p106 = scmp.eq.s32.totalorder %s24, 0
      %p107 = por %p105, %p106
      %s109 = sadd.s32 %s108, 1
      %p112 = scmp.eq.s32.totalorder %s18, 1
      %p113 = scmp.ne.s32.totalorder %s108, %s110
      %p114 = scmp.eq.s32.totalorder %s18, 0
      %p115 = por %p113, %p114
      %p116 = scmp.ne.s32.totalorder %s108, %s110
      %p117 = scmp.eq.s32.totalorder %s23, 1
      %p118 = por %p116, %p117
      %p119 = scmp.ne.s32.totalorder %s110, %s111
      %p120 = scmp.eq.s32.totalorder %s23, 0
      %p121 = por %p119, %p120
      %p122 = scmp.ne.s32.totalorder %s110, %s111
      %p123 = scmp.eq.s32.totalorder %s24, 1
      %p124 = por %p122, %p123
      %p126 = scmp.ne.s32.totalorder %s111, %s125
      %p127 = scmp.eq.s32.totalorder %s24, 0
      %p128 = por %p126, %p127
      %s130 = sadd.s32 %s129, 1
      %p133 = scmp.eq.s32.totalorder %s18, 1
      %p134 = scmp.ne.s32.totalorder %s129, %s131
      %p135 = scmp.eq.s32.totalorder %s18, 0
      %p136 = por %p134, %p135
      %p137 = scmp.ne.s32.totalorder %s129, %s131
      %p138 = scmp.eq.s32.totalorder %s23, 1
      %p139 = por %p137, %p138
      %p140 = scmp.ne.s32.totalorder %s131, %s132
      %p141 = scmp.eq.s32.totalorder %s23, 0
      %p142 = por %p140, %p141
      %p143 = scmp.ne.s32.totalorder %s131, %s132
      %p144 = scmp.eq.s32.totalorder %s24, 1
      %p145 = por %p143, %p144
      %p147 = scmp.ne.s32.totalorder %s132, %s146
      %p148 = scmp.eq.s32.totalorder %s24, 0
      %p149 = por %p147, %p148
      %s150 = ssub.s32 %s25, %s37
      %p151 = scmp.eq.s32.totalorder %s150, 0
      %s153 = sadd.s32 %s152, 1
      %s154 = scalar_select %p151, %s152, %s153
      %p157 = pneg %p151
      %p158 = scmp.eq.s32.totalorder %s18, 1
      %p159 = por %p157, %p158
      %p160 = scmp.ne.s32.totalorder %s152, %s155
      %p161 = scmp.eq.s32.totalorder %s18, 0
      %p162 = por %p160, %p161
      %p163 = scmp.ne.s32.totalorder %s152, %s155
      %p164 = scmp.eq.s32.totalorder %s23, 1
      %p165 = por %p163, %p164
      %p166 = scmp.ne.s32.totalorder %s155, %s156
      %p167 = scmp.eq.s32.totalorder %s23, 0
      %p168 = por %p166, %p167
      %p169 = scmp.ne.s32.totalorder %s155, %s156
      %p170 = scmp.eq.s32.totalorder %s24, 1
      %p171 = por %p169, %p170
      %p173 = scmp.ne.s32.totalorder %s156, %s172
      %p174 = scmp.eq.s32.totalorder %s24, 0
      %p175 = por %p173, %p174
      %p176 = scmp.le.s32.totalorder 1, %s18
      %p177 = scmp.lt.s32.totalorder %s18, 3
      %p178 = pnand %p176, %p177
      %p179 = pneg %p178
      // Predicated region
      $region9: #{tpu_custom_call.1} parent=5 // pred_check
        _
      $region10: #{tpu_custom_call.1} parent=5 // pred_check_branch
        %181 = sbr.rel (%p178) target = $region12
      $region11: #{tpu_custom_call.1} parent=5 // pred_region
        %s182 = ssub.s32 %s18, 1
        // Predicated region
        $region13: #{tpu_custom_call.1} parent=11 // pred_check
          %p183 = pneg %p79
        $region14: #{tpu_custom_call.1} parent=11 // pred_check_branch
          %185 = sbr.rel (%p183) target = $region16
        $region15: #{tpu_custom_call.1} parent=11 // pred_region
          %s187 = ssub.s32 2048, 2048
          %188 = vsyncadd [#allocation7], %s187
          %s189 = sshll.u32 [#allocation6], 4
          %s190 = int_to_ptr.vmem [resolvable:$true] %s189
          %195 = dma.hbm_to_vmem [thread:$0]  %s1, 2048, %s190, [#allocation7], 64, 64, 4
        $region16: #{tpu_custom_call.1} parent=11 // pred_fallthru
          _
        // Predicated region
        $region17: #{tpu_custom_call.1} parent=11 // pred_check
          %p196 = pneg %p100
        $region18: #{tpu_custom_call.1} parent=11 // pred_check_branch
          %198 = sbr.rel (%p196) target = $region20
        $region19: #{tpu_custom_call.1} parent=11 // pred_region
          _
        $region20: #{tpu_custom_call.1} parent=11 // pred_fallthru
          _
        // Predicated region
        $region21: #{tpu_custom_call.1} parent=11 // pred_check
          %p199 = pneg %p121
        $region22: #{tpu_custom_call.1} parent=11 // pred_check_branch
          %201 = sbr.rel (%p199) target = $region24
        $region23: #{tpu_custom_call.1} parent=11 // pred_region
          _
        $region24: #{tpu_custom_call.1} parent=11 // pred_fallthru
          _
        // Predicated region
        $region25: #{tpu_custom_call.1} parent=11 // pred_check
          %p202 = pneg %p142
        $region26: #{tpu_custom_call.1} parent=11 // pred_check_branch
          %204 = sbr.rel (%p202) target = $region28
        $region27: #{tpu_custom_call.1} parent=11 // pred_region
          _
        $region28: #{tpu_custom_call.1} parent=11 // pred_fallthru
          _
      $region12: #{tpu_custom_call.1} parent=5 // pred_fallthru
        _
      %p205 = scmp.lt.s32.totalorder %s18, 2
      // Predicated region
      $region29: #{tpu_custom_call.1} parent=5 // pred_check
        %p206 = pneg %p205
      $region30: #{tpu_custom_call.1} parent=5 // pred_check_branch
        %208 = sbr.rel (%p206) target = $region32
      $region31: #{tpu_custom_call.1} parent=5 // pred_region
        // Predicated region
        $region33: #{tpu_custom_call.1} parent=31 // pred_check
          %p209 = pneg %p52
        $region34: #{tpu_custom_call.1} parent=31 // pred_check_branch
          %211 = sbr.rel (%p209) target = $region36
        $region35: #{tpu_custom_call.1} parent=31 // pred_region
          %s212 = sand.u32 %s42, 1
          %s213 = scalar_lea.sflag [#allocation4], %s212
          %s214 = sand.u32 %s42, 1
          %s215 = smul.addr %s214, 512
          %s216 = scalar_lea.vmem [#allocation3], %s215
          %s217 = smul.u32 8, %s25
          %s218 = smul.u32 8, %s26
          %s220 = ssub.s32 8192, 8192
          %221 = vsyncadd %s213, %s220
          %s222 = smul.addr %s218, 2
          %s223 = smul.addr %s217, 16
          %s224 = sadd.s32 %s222, %s223
          %s225 = smul.addr %s224, 64
          %s226 = scalar_lea.hbm %s0, %s225
          %s227 = sshll.u32 %s216, 4
          %s228 = int_to_ptr.vmem [resolvable:$true] %s227
          %233 = dma.hbm_to_vmem [thread:$0]  %s226, 8192, %s228, %s213, 128, 128, 8
        $region36: #{tpu_custom_call.1} parent=31 // pred_fallthru
          _
      $region32: #{tpu_custom_call.1} parent=5 // pred_fallthru
        _
      %p234 = scmp.le.s32.totalorder 1, %s18
      %p235 = scmp.lt.s32.totalorder %s18, 3
      %p236 = pnand %p234, %p235
      %p237 = pneg %p236
      // Predicated region
      $region37: #{tpu_custom_call.1} parent=5 // pred_check
        _
      $region38: #{tpu_custom_call.1} parent=5 // pred_check_branch
        %239 = sbr.rel (%p236) target = $region40
      $region39: #{tpu_custom_call.1} parent=5 // pred_region
        %s240 = ssub.s32 %s18, 1
        %s241 = sand.u32 %s45, 1
        %s242 = scalar_lea.sflag [#allocation4], %s241
        %s243 = sand.u32 %s45, 1
        %s244 = smul.addr %s243, 512
        %s245 = scalar_lea.vmem [#allocation3], %s244
        // Predicated region
        $region41: #{tpu_custom_call.1} parent=39 // pred_check
          %p246 = pneg %p58
        $region42: #{tpu_custom_call.1} parent=39 // pred_check_branch
          %248 = sbr.rel (%p246) target = $region44
        $region43: #{tpu_custom_call.1} parent=39 // pred_region
          %249 = dma.done %s242, 8192
        $region44: #{tpu_custom_call.1} parent=39 // pred_fallthru
          _
        // Predicated region
        $region45: #{tpu_custom_call.1} parent=39 // pred_check
          %p250 = pneg %p79
        $region46: #{tpu_custom_call.1} parent=39 // pred_check_branch
          %252 = sbr.rel (%p250) target = $region48
        $region47: #{tpu_custom_call.1} parent=39 // pred_region
          %253 = dma.done [#allocation7], 2048
        $region48: #{tpu_custom_call.1} parent=39 // pred_fallthru
          _
        %s254 = sand.u32 %s45, 1
        %s255 = scalar_lea.sflag [#allocation4], %s254
        %s256 = sand.u32 %s45, 1
        %s257 = smul.addr %s256, 512
        %s258 = scalar_lea.vmem [#allocation3], %s257
        %p259 = pneg %p58
        %p260 = pneg %p55
        %p261 = pneg %p79
        %p262 = pneg %p76
        %p263 = pneg %p100
        %p264 = pneg %p97
        %p265 = pneg %p121
        %p266 = pneg %p118
        %p267 = pneg %p142
        %p268 = pneg %p139
        %p269 = pneg %p168
        %p270 = pneg %p165
        %s271 = sand.u32 %s155, 1
        %s272 = scalar_lea.sflag [#allocation5], %s271
        %s273 = sand.u32 %s155, 1
        %s274 = smul.addr %s273, 8
        %s275 = scalar_lea.vmem [#allocation8], %s274
        %s276 = smul.u32 8, %s27
        %s277 = smul.u32 8, %s28
        %p279 = scmp.eq.s32.totalorder %s28, 0
        // Predicated region
        $region49: #{tpu_custom_call.1} parent=39 // pred_check
          %p280 = pneg %p279
        $region50: #{tpu_custom_call.1} parent=39 // pred_check_branch
          %282 = sbr.rel (%p280) target = $region52
        $region51: #{tpu_custom_call.1} parent=39 // pred_region
          %283 = vst [vmem:[#allocation2] sm:$0xff] 0.0
        $region52: #{tpu_custom_call.1} parent=39 // pred_fallthru
          _
        %v284 = vld [vmem:[%s245] sm:$0xff]
        %v285 = vld [vmem:[%s245 + $0x8] sm:$0xff]
        %v286 = vld [vmem:[%s245 + $0x10] sm:$0xff]
        %v287 = vld [vmem:[%s245 + $0x18] sm:$0xff]
        %v288 = vld [vmem:[%s245 + $0x20] sm:$0xff]
        %v289 = vld [vmem:[%s245 + $0x28] sm:$0xff]
        %v290 = vld [vmem:[%s245 + $0x30] sm:$0xff]
        %v291 = vld [vmem:[%s245 + $0x38] sm:$0xff]
        %v292 = vld [vmem:[%s245 + $0x40] sm:$0xff]
        %v293 = vld [vmem:[%s245 + $0x48] sm:$0xff]
        %v294 = vld [vmem:[%s245 + $0x50] sm:$0xff]
        %v295 = vld [vmem:[%s245 + $0x58] sm:$0xff]
        %v296 = vld [vmem:[%s245 + $0x60] sm:$0xff]
        %v297 = vld [vmem:[%s245 + $0x68] sm:$0xff]
        %v298 = vld [vmem:[%s245 + $0x70] sm:$0xff]
        %v299 = vld [vmem:[%s245 + $0x78] sm:$0xff]
        %v300 = vld [vmem:[%s245 + $0x80] sm:$0xff]
        %v301 = vld [vmem:[%s245 + $0x88] sm:$0xff]
        %v302 = vld [vmem:[%s245 + $0x90] sm:$0xff]
        %v303 = vld [vmem:[%s245 + $0x98] sm:$0xff]
        %v304 = vld [vmem:[%s245 + $0xa0] sm:$0xff]
        %v305 = vld [vmem:[%s245 + $0xa8] sm:$0xff]
        %v306 = vld [vmem:[%s245 + $0xb0] sm:$0xff]
        %v307 = vld [vmem:[%s245 + $0xb8] sm:$0xff]
        %v308 = vld [vmem:[%s245 + $0xc0] sm:$0xff]
        %v309 = vld [vmem:[%s245 + $0xc8] sm:$0xff]
        %v310 = vld [vmem:[%s245 + $0xd0] sm:$0xff]
        %v311 = vld [vmem:[%s245 + $0xd8] sm:$0xff]
        %v312 = vld [vmem:[%s245 + $0xe0] sm:$0xff]
        %v313 = vld [vmem:[%s245 + $0xe8] sm:$0xff]
        %v314 = vld [vmem:[%s245 + $0xf0] sm:$0xff]
        %v315 = vld [vmem:[%s245 + $0xf8] sm:$0xff]
        %v316 = vld [vmem:[%s245 + $0x100] sm:$0xff]
        %v317 = vld [vmem:[%s245 + $0x108] sm:$0xff]
        %v318 = vld [vmem:[%s245 + $0x110] sm:$0xff]
        %v319 = vld [vmem:[%s245 + $0x118] sm:$0xff]
        %v320 = vld [vmem:[%s245 + $0x120] sm:$0xff]
        %v321 = vld [vmem:[%s245 + $0x128] sm:$0xff]
        %v322 = vld [vmem:[%s245 + $0x130] sm:$0xff]
        %v323 = vld [vmem:[%s245 + $0x138] sm:$0xff]
        %v324 = vld [vmem:[%s245 + $0x140] sm:$0xff]
        %v325 = vld [vmem:[%s245 + $0x148] sm:$0xff]
        %v326 = vld [vmem:[%s245 + $0x150] sm:$0xff]
        %v327 = vld [vmem:[%s245 + $0x158] sm:$0xff]
        %v328 = vld [vmem:[%s245 + $0x160] sm:$0xff]
        %v329 = vld [vmem:[%s245 + $0x168] sm:$0xff]
        %v330 = vld [vmem:[%s245 + $0x170] sm:$0xff]
        %v331 = vld [vmem:[%s245 + $0x178] sm:$0xff]
        %v332 = vld [vmem:[%s245 + $0x180] sm:$0xff]
        %v333 = vld [vmem:[%s245 + $0x188] sm:$0xff]
        %v334 = vld [vmem:[%s245 + $0x190] sm:$0xff]
        %v335 = vld [vmem:[%s245 + $0x198] sm:$0xff]
        %v336 = vld [vmem:[%s245 + $0x1a0] sm:$0xff]
        %v337 = vld [vmem:[%s245 + $0x1a8] sm:$0xff]
        %v338 = vld [vmem:[%s245 + $0x1b0] sm:$0xff]
        %v339 = vld [vmem:[%s245 + $0x1b8] sm:$0xff]
        %v340 = vld [vmem:[%s245 + $0x1c0] sm:$0xff]
        %v341 = vld [vmem:[%s245 + $0x1c8] sm:$0xff]
        %v342 = vld [vmem:[%s245 + $0x1d0] sm:$0xff]
        %v343 = vld [vmem:[%s245 + $0x1d8] sm:$0xff]
        %v344 = vld [vmem:[%s245 + $0x1e0] sm:$0xff]
        %v345 = vld [vmem:[%s245 + $0x1e8] sm:$0xff]
        %v346 = vld [vmem:[%s245 + $0x1f0] sm:$0xff]
        %v347 = vld [vmem:[%s245 + $0x1f8] sm:$0xff]
        %v348 = vld [vmem:[#allocation6] sm:$0xf]
        %v349 = vld [vmem:[#allocation6 + $0x4] sm:$0xf]
        %v350 = vld [vmem:[#allocation6 + $0x8] sm:$0xf]
        %v351 = vld [vmem:[#allocation6 + $0xc] sm:$0xf]
        %v352 = vld [vmem:[#allocation6 + $0x10] sm:$0xf]
        %v353 = vld [vmem:[#allocation6 + $0x14] sm:$0xf]
        %v354 = vld [vmem:[#allocation6 + $0x18] sm:$0xf]
        %v355 = vld [vmem:[#allocation6 + $0x1c] sm:$0xf]
        %v356 = vld [vmem:[#allocation6 + $0x20] sm:$0xf]
        %v357 = vld [vmem:[#allocation6 + $0x24] sm:$0xf]
        %v358 = vld [vmem:[#allocation6 + $0x28] sm:$0xf]
        %v359 = vld [vmem:[#allocation6 + $0x2c] sm:$0xf]
        %v360 = vld [vmem:[#allocation6 + $0x30] sm:$0xf]
        %v361 = vld [vmem:[#allocation6 + $0x34] sm:$0xf]
        %v362 = vld [vmem:[#allocation6 + $0x38] sm:$0xf]
        %v363 = vld [vmem:[#allocation6 + $0x3c] sm:$0xf]
        %v364 = vld [vmem:[#allocation6 + $0x40] sm:$0xf]
        %v365 = vld [vmem:[#allocation6 + $0x44] sm:$0xf]
        %v366 = vld [vmem:[#allocation6 + $0x48] sm:$0xf]
        %v367 = vld [vmem:[#allocation6 + $0x4c] sm:$0xf]
        %v368 = vld [vmem:[#allocation6 + $0x50] sm:$0xf]
        %v369 = vld [vmem:[#allocation6 + $0x54] sm:$0xf]
        %v370 = vld [vmem:[#allocation6 + $0x58] sm:$0xf]
        %v371 = vld [vmem:[#allocation6 + $0x5c] sm:$0xf]
        %v372 = vld [vmem:[#allocation6 + $0x60] sm:$0xf]
        %v373 = vld [vmem:[#allocation6 + $0x64] sm:$0xf]
        %v374 = vld [vmem:[#allocation6 + $0x68] sm:$0xf]
        %v375 = vld [vmem:[#allocation6 + $0x6c] sm:$0xf]
        %v376 = vld [vmem:[#allocation6 + $0x70] sm:$0xf]
        %v377 = vld [vmem:[#allocation6 + $0x74] sm:$0xf]
        %v378 = vld [vmem:[#allocation6 + $0x78] sm:$0xf]
        %v379 = vld [vmem:[#allocation6 + $0x7c] sm:$0xf]
        %v380 = vld [vmem:[%s2] sm:$0x1]
        %v382 = vlaneseq
        %v383 = vshrl.u32 %v382, 7
        %v384 = vsub.s32 0, %v383
        %v385 = vrot.slane %v380, %v384
        %v451 = vunpack.c.l.b16 %v284
        %v452 = vunpack.c.h.b16 %v284
        %v453 = vunpack.c.l.b16 %v285
        %v454 = vunpack.c.h.b16 %v285
        %v455 = vunpack.c.l.b16 %v286
        %v456 = vunpack.c.h.b16 %v286
        %v457 = vunpack.c.l.b16 %v287
        %v458 = vunpack.c.h.b16 %v287
        %v459 = vunpack.c.l.b16 %v288
        %v460 = vunpack.c.h.b16 %v288
        %v461 = vunpack.c.l.b16 %v289
        %v462 = vunpack.c.h.b16 %v289
        %v463 = vunpack.c.l.b16 %v290
        %v464 = vunpack.c.h.b16 %v290
        %v465 = vunpack.c.l.b16 %v291
        %v466 = vunpack.c.h.b16 %v291
        %v467 = vunpack.c.l.b16 %v292
        %v468 = vunpack.c.h.b16 %v292
        %v469 = vunpack.c.l.b16 %v293
        %v470 = vunpack.c.h.b16 %v293
        %v471 = vunpack.c.l.b16 %v294
        %v472 = vunpack.c.h.b16 %v294
        %v473 = vunpack.c.l.b16 %v295
        %v474 = vunpack.c.h.b16 %v295
        %v475 = vunpack.c.l.b16 %v296
        %v476 = vunpack.c.h.b16 %v296
        %v477 = vunpack.c.l.b16 %v297
        %v478 = vunpack.c.h.b16 %v297
        %v479 = vunpack.c.l.b16 %v298
        %v480 = vunpack.c.h.b16 %v298
        %v481 = vunpack.c.l.b16 %v299
        %v482 = vunpack.c.h.b16 %v299
        %v483 = vunpack.c.l.b16 %v300
        %v484 = vunpack.c.h.b16 %v300
        %v485 = vunpack.c.l.b16 %v301
        %v486 = vunpack.c.h.b16 %v301
        %v487 = vunpack.c.l.b16 %v302
        %v488 = vunpack.c.h.b16 %v302
        %v489 = vunpack.c.l.b16 %v303
        %v490 = vunpack.c.h.b16 %v303
        %v491 = vunpack.c.l.b16 %v304
        %v492 = vunpack.c.h.b16 %v304
        %v493 = vunpack.c.l.b16 %v305
        %v494 = vunpack.c.h.b16 %v305
        %v495 = vunpack.c.l.b16 %v306
        %v496 = vunpack.c.h.b16 %v306
        %v497 = vunpack.c.l.b16 %v307
        %v498 = vunpack.c.h.b16 %v307
        %v499 = vunpack.c.l.b16 %v308
        %v500 = vunpack.c.h.b16 %v308
        %v501 = vunpack.c.l.b16 %v309
        %v502 = vunpack.c.h.b16 %v309
        %v503 = vunpack.c.l.b16 %v310
        %v504 = vunpack.c.h.b16 %v310
        %v505 = vunpack.c.l.b16 %v311
        %v506 = vunpack.c.h.b16 %v311
        %v507 = vunpack.c.l.b16 %v312
        %v508 = vunpack.c.h.b16 %v312
        %v509 = vunpack.c.l.b16 %v313
        %v510 = vunpack.c.h.b16 %v313
        %v511 = vunpack.c.l.b16 %v314
        %v512 = vunpack.c.h.b16 %v314
        %v513 = vunpack.c.l.b16 %v315
        %v514 = vunpack.c.h.b16 %v315
        %v515 = vunpack.c.l.b16 %v316
        %v516 = vunpack.c.h.b16 %v316
        %v517 = vunpack.c.l.b16 %v317
        %v518 = vunpack.c.h.b16 %v317
        %v519 = vunpack.c.l.b16 %v318
        %v520 = vunpack.c.h.b16 %v318
        %v521 = vunpack.c.l.b16 %v319
        %v522 = vunpack.c.h.b16 %v319
        %v523 = vunpack.c.l.b16 %v320
        %v524 = vunpack.c.h.b16 %v320
        %v525 = vunpack.c.l.b16 %v321
        %v526 = vunpack.c.h.b16 %v321
        %v527 = vunpack.c.l.b16 %v322
        %v528 = vunpack.c.h.b16 %v322
        %v529 = vunpack.c.l.b16 %v323
        %v530 = vunpack.c.h.b16 %v323
        %v531 = vunpack.c.l.b16 %v324
        %v532 = vunpack.c.h.b16 %v324
        %v533 = vunpack.c.l.b16 %v325
        %v534 = vunpack.c.h.b16 %v325
        %v535 = vunpack.c.l.b16 %v326
        %v536 = vunpack.c.h.b16 %v326
        %v537 = vunpack.c.l.b16 %v327
        %v538 = vunpack.c.h.b16 %v327
        %v539 = vunpack.c.l.b16 %v328
        %v540 = vunpack.c.h.b16 %v328
        %v541 = vunpack.c.l.b16 %v329
        %v542 = vunpack.c.h.b16 %v329
        %v543 = vunpack.c.l.b16 %v330
        %v544 = vunpack.c.h.b16 %v330
        %v545 = vunpack.c.l.b16 %v331
        %v546 = vunpack.c.h.b16 %v331
        %v547 = vunpack.c.l.b16 %v332
        %v548 = vunpack.c.h.b16 %v332
        %v549 = vunpack.c.l.b16 %v333
        %v550 = vunpack.c.h.b16 %v333
        %v551 = vunpack.c.l.b16 %v334
        %v552 = vunpack.c.h.b16 %v334
        %v553 = vunpack.c.l.b16 %v335
        %v554 = vunpack.c.h.b16 %v335
        %v555 = vunpack.c.l.b16 %v336
        %v556 = vunpack.c.h.b16 %v336
        %v557 = vunpack.c.l.b16 %v337
        %v558 = vunpack.c.h.b16 %v337
        %v559 = vunpack.c.l.b16 %v338
        %v560 = vunpack.c.h.b16 %v338
        %v561 = vunpack.c.l.b16 %v339
        %v562 = vunpack.c.h.b16 %v339
        %v563 = vunpack.c.l.b16 %v340
        %v564 = vunpack.c.h.b16 %v340
        %v565 = vunpack.c.l.b16 %v341
        %v566 = vunpack.c.h.b16 %v341
        %v567 = vunpack.c.l.b16 %v342
        %v568 = vunpack.c.h.b16 %v342
        %v569 = vunpack.c.l.b16 %v343
        %v570 = vunpack.c.h.b16 %v343
        %v571 = vunpack.c.l.b16 %v344
        %v572 = vunpack.c.h.b16 %v344
        %v573 = vunpack.c.l.b16 %v345
        %v574 = vunpack.c.h.b16 %v345
        %v575 = vunpack.c.l.b16 %v346
        %v576 = vunpack.c.h.b16 %v346
        %v577 = vunpack.c.l.b16 %v347
        %v578 = vunpack.c.h.b16 %v347
        %v579 = vpack.c.b16 %v453, %v451
        %v580 = vpack.c.b16 %v454, %v452
        %v581 = vpack.c.b16 %v457, %v455
        %v582 = vpack.c.b16 %v458, %v456
        %v583 = vpack.c.b16 %v461, %v459
        %v584 = vpack.c.b16 %v462, %v460
        %v585 = vpack.c.b16 %v465, %v463
        %v586 = vpack.c.b16 %v466, %v464
        %v587 = vpack.c.b16 %v469, %v467
        %v588 = vpack.c.b16 %v470, %v468
        %v589 = vpack.c.b16 %v473, %v471
        %v590 = vpack.c.b16 %v474, %v472
        %v591 = vpack.c.b16 %v477, %v475
        %v592 = vpack.c.b16 %v478, %v476
        %v593 = vpack.c.b16 %v481, %v479
        %v594 = vpack.c.b16 %v482, %v480
        %v595 = vpack.c.b16 %v485, %v483
        %v596 = vpack.c.b16 %v486, %v484
        %v597 = vpack.c.b16 %v489, %v487
        %v598 = vpack.c.b16 %v490, %v488
        %v599 = vpack.c.b16 %v493, %v491
        %v600 = vpack.c.b16 %v494, %v492
        %v601 = vpack.c.b16 %v497, %v495
        %v602 = vpack.c.b16 %v498, %v496
        %v603 = vpack.c.b16 %v501, %v499
        %v604 = vpack.c.b16 %v502, %v500
        %v605 = vpack.c.b16 %v505, %v503
        %v606 = vpack.c.b16 %v506, %v504
        %v607 = vpack.c.b16 %v509, %v507
        %v608 = vpack.c.b16 %v510, %v508
        %v609 = vpack.c.b16 %v513, %v511
        %v610 = vpack.c.b16 %v514, %v512
        %v611 = vpack.c.b16 %v517, %v515
        %v612 = vpack.c.b16 %v518, %v516
        %v613 = vpack.c.b16 %v521, %v519
        %v614 = vpack.c.b16 %v522, %v520
        %v615 = vpack.c.b16 %v525, %v523
        %v616 = vpack.c.b16 %v526, %v524
        %v617 = vpack.c.b16 %v529, %v527
        %v618 = vpack.c.b16 %v530, %v528
        %v619 = vpack.c.b16 %v533, %v531
        %v620 = vpack.c.b16 %v534, %v532
        %v621 = vpack.c.b16 %v537, %v535
        %v622 = vpack.c.b16 %v538, %v536
        %v623 = vpack.c.b16 %v541, %v539
        %v624 = vpack.c.b16 %v542, %v540
        %v625 = vpack.c.b16 %v545, %v543
        %v626 = vpack.c.b16 %v546, %v544
        %v627 = vpack.c.b16 %v549, %v547
        %v628 = vpack.c.b16 %v550, %v548
        %v629 = vpack.c.b16 %v553, %v551
        %v630 = vpack.c.b16 %v554, %v552
        %v631 = vpack.c.b16 %v557, %v555
        %v632 = vpack.c.b16 %v558, %v556
        %v633 = vpack.c.b16 %v561, %v559
        %v634 = vpack.c.b16 %v562, %v560
        %v635 = vpack.c.b16 %v565, %v563
        %v636 = vpack.c.b16 %v566, %v564
        %v637 = vpack.c.b16 %v569, %v567
        %v638 = vpack.c.b16 %v570, %v568
        %v639 = vpack.c.b16 %v573, %v571
        %v640 = vpack.c.b16 %v574, %v572
        %v641 = vpack.c.b16 %v577, %v575
        %v642 = vpack.c.b16 %v578, %v576
        %v739 = vunpack.c.l.b16 %v348
        %v740 = vunpack.c.l.b16 %v349
        %v741 = vunpack.c.l.b16 %v350
        %v742 = vunpack.c.l.b16 %v351
        %v743 = vunpack.c.l.b16 %v352
        %v744 = vunpack.c.l.b16 %v353
        %v745 = vunpack.c.l.b16 %v354
        %v746 = vunpack.c.l.b16 %v355
        %v747 = vunpack.c.l.b16 %v356
        %v748 = vunpack.c.l.b16 %v357
        %v749 = vunpack.c.l.b16 %v358
        %v750 = vunpack.c.l.b16 %v359
        %v751 = vunpack.c.l.b16 %v360
        %v752 = vunpack.c.l.b16 %v361
        %v753 = vunpack.c.l.b16 %v362
        %v754 = vunpack.c.l.b16 %v363
        %v755 = vunpack.c.l.b16 %v364
        %v756 = vunpack.c.l.b16 %v365
        %v757 = vunpack.c.l.b16 %v366
        %v758 = vunpack.c.l.b16 %v367
        %v759 = vunpack.c.l.b16 %v368
        %v760 = vunpack.c.l.b16 %v369
        %v761 = vunpack.c.l.b16 %v370
        %v762 = vunpack.c.l.b16 %v371
        %v763 = vunpack.c.l.b16 %v372
        %v764 = vunpack.c.l.b16 %v373
        %v765 = vunpack.c.l.b16 %v374
        %v766 = vunpack.c.l.b16 %v375
        %v767 = vunpack.c.l.b16 %v376
        %v768 = vunpack.c.l.b16 %v377
        %v769 = vunpack.c.l.b16 %v378
        %v770 = vunpack.c.l.b16 %v379
        %v771 = vpack.c.b16 %v740, %v739
        %v772 = vpack.c.b16 %v742, %v741
        %v773 = vpack.c.b16 %v744, %v743
        %v774 = vpack.c.b16 %v746, %v745
        %v775 = vpack.c.b16 %v748, %v747
        %v776 = vpack.c.b16 %v750, %v749
        %v777 = vpack.c.b16 %v752, %v751
        %v778 = vpack.c.b16 %v754, %v753
        %v779 = vpack.c.b16 %v756, %v755
        %v780 = vpack.c.b16 %v758, %v757
        %v781 = vpack.c.b16 %v760, %v759
        %v782 = vpack.c.b16 %v762, %v761
        %v783 = vpack.c.b16 %v764, %v763
        %v784 = vpack.c.b16 %v766, %v765
        %v785 = vpack.c.b16 %v768, %v767
        %v786 = vpack.c.b16 %v770, %v769
        %803 = vmatprep.subr.bf16.mxu0 0
        %804 = vmatpush1.bf16.msra.mxu0 %v778
        %805 = vmatprep.subr.bf16.mxu0 0
        %806 = vmatpush1.bf16.msra.mxu0 %v777
        %807 = vmatprep.subr.bf16.mxu0 0
        %808 = vmatpush1.bf16.msra.mxu0 %v776
        %809 = vmatprep.subr.bf16.mxu0 0
        %810 = vmatpush1.bf16.msra.mxu0 %v775
        %811 = vmatprep.subr.bf16.mxu0 0
        %812 = vmatpush1.bf16.msra.mxu0 %v774
        %813 = vmatprep.subr.bf16.mxu0 0
        %814 = vmatpush1.bf16.msra.mxu0 %v773
        %815 = vmatprep.subr.bf16.mxu0 0
        %816 = vmatpush1.bf16.msra.mxu0 %v772
        %817 = vmatprep.subr.bf16.mxu0 0
        %818 = vmatpush1.bf16.msra.mxu0 %v771
        %819 = vmatprep.subr.bf16.mxu0 0
        %820 = vmatpush2.bf16.msra.mxu0 %v786
        %821 = vmatprep.subr.bf16.mxu0 0
        %822 = vmatpush2.bf16.msra.mxu0 %v785
        %823 = vmatprep.subr.bf16.mxu0 0
        %824 = vmatpush2.bf16.msra.mxu0 %v784
        %825 = vmatprep.subr.bf16.mxu0 0
        %826 = vmatpush2.bf16.msra.mxu0 %v783
        %827 = vmatprep.subr.bf16.mxu0 0
        %828 = vmatpush2.bf16.msra.mxu0 %v782
        %829 = vmatprep.subr.bf16.mxu0 0
        %830 = vmatpush2.bf16.msra.mxu0 %v781
        %831 = vmatprep.subr.bf16.mxu0 0
        %832 = vmatpush2.bf16.msra.mxu0 %v780
        %833 = vmatprep.subr.bf16.mxu0 0
        %834 = vmatpush2.bf16.msra.mxu0 %v779
        %835 = vmatprep.mubr.bf16.mxu0 %v580
        %836 = vmatmul.mubr.bf16.gmra.mxu0 %v579
        %v837 = vpop.f32.mrf.mxu0
        %v838 = vadd.f32 %v385, %v837
        %v839 = vpop.f32.mrf.mxu0
        %v840 = vpop.f32.mrf.mxu0
        %v841 = vadd.f32 %v385, %v840
        %v842 = vpop.f32.mrf.mxu0
        %843 = vmatprep.mubr.bf16.mxu0 %v582
        %844 = vmatmul.mubr.bf16.gmra.mxu0 %v581
        %v845 = vpop.f32.mrf.mxu0
        %v846 = vadd.f32 %v385, %v845
        %v847 = vpop.f32.mrf.mxu0
        %v848 = vpop.f32.mrf.mxu0
        %v849 = vadd.f32 %v385, %v848
        %v850 = vpop.f32.mrf.mxu0
        %851 = vmatprep.mubr.bf16.mxu0 %v584
        %852 = vmatmul.mubr.bf16.gmra.mxu0 %v583
        %v853 = vpop.f32.mrf.mxu0
        %v854 = vadd.f32 %v385, %v853
        %v855 = vpop.f32.mrf.mxu0
        %v856 = vpop.f32.mrf.mxu0
        %v857 = vadd.f32 %v385, %v856
        %v858 = vpop.f32.mrf.mxu0
        %859 = vmatprep.mubr.bf16.mxu0 %v586
        %860 = vmatmul.mubr.bf16.gmra.mxu0 %v585
        %v861 = vpop.f32.mrf.mxu0
        %v862 = vadd.f32 %v385, %v861
        %v863 = vpop.f32.mrf.mxu0
        %v864 = vpop.f32.mrf.mxu0
        %v865 = vadd.f32 %v385, %v864
        %v866 = vpop.f32.mrf.mxu0
        %867 = vmatprep.mubr.bf16.mxu0 %v588
        %868 = vmatmul.mubr.bf16.gmra.mxu0 %v587
        %v869 = vpop.f32.mrf.mxu0
        %v870 = vadd.f32 %v385, %v869
        %v871 = vpop.f32.mrf.mxu0
        %v872 = vpop.f32.mrf.mxu0
        %v873 = vadd.f32 %v385, %v872
        %v874 = vpop.f32.mrf.mxu0
        %875 = vmatprep.mubr.bf16.mxu0 %v590
        %876 = vmatmul.mubr.bf16.gmra.mxu0 %v589
        %v877 = vpop.f32.mrf.mxu0
        %v878 = vadd.f32 %v385, %v877
        %v879 = vpop.f32.mrf.mxu0
        %v880 = vpop.f32.mrf.mxu0
        %v881 = vadd.f32 %v385, %v880
        %v882 = vpop.f32.mrf.mxu0
        %883 = vmatprep.mubr.bf16.mxu0 %v592
        %884 = vmatmul.mubr.bf16.gmra.mxu0 %v591
        %v885 = vpop.f32.mrf.mxu0
        %v886 = vadd.f32 %v385, %v885
        %v887 = vpop.f32.mrf.mxu0
        %v888 = vpop.f32.mrf.mxu0
        %v889 = vadd.f32 %v385, %v888
        %v890 = vpop.f32.mrf.mxu0
        %891 = vmatprep.mubr.bf16.mxu0 %v594
        %892 = vmatmul.mubr.bf16.gmra.mxu0 %v593
        %v893 = vpop.f32.mrf.mxu0
        %v894 = vadd.f32 %v385, %v893
        %v895 = vpop.f32.mrf.mxu0
        %v896 = vpop.f32.mrf.mxu0
        %v897 = vadd.f32 %v385, %v896
        %v898 = vpop.f32.mrf.mxu0
        %899 = vmatprep.mubr.bf16.mxu0 %v596
        %900 = vmatmul.mubr.bf16.gmra.mxu0 %v595
        %v901 = vpop.f32.mrf.mxu0
        %v902 = vadd.f32 %v385, %v901
        %v903 = vpop.f32.mrf.mxu0
        %v904 = vpop.f32.mrf.mxu0
        %v905 = vadd.f32 %v385, %v904
        %v906 = vpop.f32.mrf.mxu0
        %907 = vmatprep.mubr.bf16.mxu0 %v598
        %908 = vmatmul.mubr.bf16.gmra.mxu0 %v597
        %v909 = vpop.f32.mrf.mxu0
        %v910 = vadd.f32 %v385, %v909
        %v911 = vpop.f32.mrf.mxu0
        %v912 = vpop.f32.mrf.mxu0
        %v913 = vadd.f32 %v385, %v912
        %v914 = vpop.f32.mrf.mxu0
        %915 = vmatprep.mubr.bf16.mxu0 %v600
        %916 = vmatmul.mubr.bf16.gmra.mxu0 %v599
        %v917 = vpop.f32.mrf.mxu0
        %v918 = vadd.f32 %v385, %v917
        %v919 = vpop.f32.mrf.mxu0
        %v920 = vpop.f32.mrf.mxu0
        %v921 = vadd.f32 %v385, %v920
        %v922 = vpop.f32.mrf.mxu0
        %923 = vmatprep.mubr.bf16.mxu0 %v602
        %924 = vmatmul.mubr.bf16.gmra.mxu0 %v601
        %v925 = vpop.f32.mrf.mxu0
        %v926 = vadd.f32 %v385, %v925
        %v927 = vpop.f32.mrf.mxu0
        %v928 = vpop.f32.mrf.mxu0
        %v929 = vadd.f32 %v385, %v928
        %v930 = vpop.f32.mrf.mxu0
        %931 = vmatprep.mubr.bf16.mxu0 %v604
        %932 = vmatmul.mubr.bf16.gmra.mxu0 %v603
        %v933 = vpop.f32.mrf.mxu0
        %v934 = vadd.f32 %v385, %v933
        %v935 = vpop.f32.mrf.mxu0
        %v936 = vpop.f32.mrf.mxu0
        %v937 = vadd.f32 %v385, %v936
        %v938 = vpop.f32.mrf.mxu0
        %939 = vmatprep.mubr.bf16.mxu0 %v606
        %940 = vmatmul.mubr.bf16.gmra.mxu0 %v605
        %v941 = vpop.f32.mrf.mxu0
        %v942 = vadd.f32 %v385, %v941
        %v943 = vpop.f32.mrf.mxu0
        %v944 = vpop.f32.mrf.mxu0
        %v945 = vadd.f32 %v385, %v944
        %v946 = vpop.f32.mrf.mxu0
        %947 = vmatprep.mubr.bf16.mxu0 %v608
        %948 = vmatmul.mubr.bf16.gmra.mxu0 %v607
        %v949 = vpop.f32.mrf.mxu0
        %v950 = vadd.f32 %v385, %v949
        %v951 = vpop.f32.mrf.mxu0
        %v952 = vpop.f32.mrf.mxu0
        %v953 = vadd.f32 %v385, %v952
        %v954 = vpop.f32.mrf.mxu0
        %955 = vmatprep.mubr.bf16.mxu0 %v610
        %956 = vmatmul.mubr.bf16.gmra.mxu0 %v609
        %v957 = vpop.f32.mrf.mxu0
        %v958 = vadd.f32 %v385, %v957
        %v959 = vpop.f32.mrf.mxu0
        %v960 = vpop.f32.mrf.mxu0
        %v961 = vadd.f32 %v385, %v960
        %v962 = vpop.f32.mrf.mxu0
        %963 = vmatprep.mubr.bf16.mxu0 %v612
        %964 = vmatmul.mubr.bf16.gmra.mxu0 %v611
        %v965 = vpop.f32.mrf.mxu0
        %v966 = vadd.f32 %v385, %v965
        %v967 = vpop.f32.mrf.mxu0
        %v968 = vpop.f32.mrf.mxu0
        %v969 = vadd.f32 %v385, %v968
        %v970 = vpop.f32.mrf.mxu0
        %971 = vmatprep.mubr.bf16.mxu0 %v614
        %972 = vmatmul.mubr.bf16.gmra.mxu0 %v613
        %v973 = vpop.f32.mrf.mxu0
        %v974 = vadd.f32 %v385, %v973
        %v975 = vpop.f32.mrf.mxu0
        %v976 = vpop.f32.mrf.mxu0
        %v977 = vadd.f32 %v385, %v976
        %v978 = vpop.f32.mrf.mxu0
        %979 = vmatprep.mubr.bf16.mxu0 %v616
        %980 = vmatmul.mubr.bf16.gmra.mxu0 %v615
        %v981 = vpop.f32.mrf.mxu0
        %v982 = vadd.f32 %v385, %v981
        %v983 = vpop.f32.mrf.mxu0
        %v984 = vpop.f32.mrf.mxu0
        %v985 = vadd.f32 %v385, %v984
        %v986 = vpop.f32.mrf.mxu0
        %987 = vmatprep.mubr.bf16.mxu0 %v618
        %988 = vmatmul.mubr.bf16.gmra.mxu0 %v617
        %v989 = vpop.f32.mrf.mxu0
        %v990 = vadd.f32 %v385, %v989
        %v991 = vpop.f32.mrf.mxu0
        %v992 = vpop.f32.mrf.mxu0
        %v993 = vadd.f32 %v385, %v992
        %v994 = vpop.f32.mrf.mxu0
        %995 = vmatprep.mubr.bf16.mxu0 %v620
        %996 = vmatmul.mubr.bf16.gmra.mxu0 %v619
        %v997 = vpop.f32.mrf.mxu0
        %v998 = vadd.f32 %v385, %v997
        %v999 = vpop.f32.mrf.mxu0
        %v1000 = vpop.f32.mrf.mxu0
        %v1001 = vadd.f32 %v385, %v1000
        %v1002 = vpop.f32.mrf.mxu0
        %1003 = vmatprep.mubr.bf16.mxu0 %v622
        %1004 = vmatmul.mubr.bf16.gmra.mxu0 %v621
        %v1005 = vpop.f32.mrf.mxu0
        %v1006 = vadd.f32 %v385, %v1005
        %v1007 = vpop.f32.mrf.mxu0
        %v1008 = vpop.f32.mrf.mxu0
        %v1009 = vadd.f32 %v385, %v1008
        %v1010 = vpop.f32.mrf.mxu0
        %1011 = vmatprep.mubr.bf16.mxu0 %v624
        %1012 = vmatmul.mubr.bf16.gmra.mxu0 %v623
        %v1013 = vpop.f32.mrf.mxu0
        %v1014 = vadd.f32 %v385, %v1013
        %v1015 = vpop.f32.mrf.mxu0
        %v1016 = vpop.f32.mrf.mxu0
        %v1017 = vadd.f32 %v385, %v1016
        %v1018 = vpop.f32.mrf.mxu0
        %1019 = vmatprep.mubr.bf16.mxu0 %v626
        %1020 = vmatmul.mubr.bf16.gmra.mxu0 %v625
        %v1021 = vpop.f32.mrf.mxu0
        %v1022 = vadd.f32 %v385, %v1021
        %v1023 = vpop.f32.mrf.mxu0
        %v1024 = vpop.f32.mrf.mxu0
        %v1025 = vadd.f32 %v385, %v1024
        %v1026 = vpop.f32.mrf.mxu0
        %1027 = vmatprep.mubr.bf16.mxu0 %v628
        %1028 = vmatmul.mubr.bf16.gmra.mxu0 %v627
        %v1029 = vpop.f32.mrf.mxu0
        %v1030 = vadd.f32 %v385, %v1029
        %v1031 = vpop.f32.mrf.mxu0
        %v1032 = vpop.f32.mrf.mxu0
        %v1033 = vadd.f32 %v385, %v1032
        %v1034 = vpop.f32.mrf.mxu0
        %1035 = vmatprep.mubr.bf16.mxu0 %v630
        %1036 = vmatmul.mubr.bf16.gmra.mxu0 %v629
        %v1037 = vpop.f32.mrf.mxu0
        %v1038 = vadd.f32 %v385, %v1037
        %v1039 = vpop.f32.mrf.mxu0
        %v1040 = vpop.f32.mrf.mxu0
        %v1041 = vadd.f32 %v385, %v1040
        %v1042 = vpop.f32.mrf.mxu0
        %1043 = vmatprep.mubr.bf16.mxu0 %v632
        %1044 = vmatmul.mubr.bf16.gmra.mxu0 %v631
        %v1045 = vpop.f32.mrf.mxu0
        %v1046 = vadd.f32 %v385, %v1045
        %v1047 = vpop.f32.mrf.mxu0
        %v1048 = vpop.f32.mrf.mxu0
        %v1049 = vadd.f32 %v385, %v1048
        %v1050 = vpop.f32.mrf.mxu0
        %1051 = vmatprep.mubr.bf16.mxu0 %v634
        %1052 = vmatmul.mubr.bf16.gmra.mxu0 %v633
        %v1053 = vpop.f32.mrf.mxu0
        %v1054 = vadd.f32 %v385, %v1053
        %v1055 = vpop.f32.mrf.mxu0
        %v1056 = vpop.f32.mrf.mxu0
        %v1057 = vadd.f32 %v385, %v1056
        %v1058 = vpop.f32.mrf.mxu0
        %1059 = vmatprep.mubr.bf16.mxu0 %v636
        %1060 = vmatmul.mubr.bf16.gmra.mxu0 %v635
        %v1061 = vpop.f32.mrf.mxu0
        %v1062 = vadd.f32 %v385, %v1061
        %v1063 = vpop.f32.mrf.mxu0
        %v1064 = vpop.f32.mrf.mxu0
        %v1065 = vadd.f32 %v385, %v1064
        %v1066 = vpop.f32.mrf.mxu0
        %1067 = vmatprep.mubr.bf16.mxu0 %v638
        %1068 = vmatmul.mubr.bf16.gmra.mxu0 %v637
        %v1069 = vpop.f32.mrf.mxu0
        %v1070 = vadd.f32 %v385, %v1069
        %v1071 = vpop.f32.mrf.mxu0
        %v1072 = vpop.f32.mrf.mxu0
        %v1073 = vadd.f32 %v385, %v1072
        %v1074 = vpop.f32.mrf.mxu0
        %1075 = vmatprep.mubr.bf16.mxu0 %v640
        %1076 = vmatmul.mubr.bf16.gmra.mxu0 %v639
        %v1077 = vpop.f32.mrf.mxu0
        %v1078 = vadd.f32 %v385, %v1077
        %v1079 = vpop.f32.mrf.mxu0
        %v1080 = vpop.f32.mrf.mxu0
        %v1081 = vadd.f32 %v385, %v1080
        %v1082 = vpop.f32.mrf.mxu0
        %1083 = vmatprep.mubr.bf16.mxu0 %v642
        %1084 = vmatmul.mubr.bf16.gmra.mxu0 %v641
        %v1085 = vpop.f32.mrf.mxu0
        %v1086 = vadd.f32 %v385, %v1085
        %v1087 = vpop.f32.mrf.mxu0
        %v1088 = vpop.f32.mrf.mxu0
        %v1089 = vadd.f32 %v385, %v1088
        %v1090 = vpop.f32.mrf.mxu0
        %1091 = vdwg.mxu0
        %v1092 = vld [vmem:[%s3] sm:$0x1]
        %v1094 = vlaneseq
        %v1095 = vshrl.u32 %v1094, 7
        %v1096 = vsub.s32 0, %v1095
        %v1097 = vrot.slane %v1092, %v1096
        %v1099 = vmul.f32 %v838, %v1097
        %v1100 = vmul.f32 %v841, %v1097
        %v1101 = vmul.f32 %v846, %v1097
        %v1102 = vmul.f32 %v849, %v1097
        %v1103 = vmul.f32 %v854, %v1097
        %v1104 = vmul.f32 %v857, %v1097
        %v1105 = vmul.f32 %v862, %v1097
        %v1106 = vmul.f32 %v865, %v1097
        %v1107 = vmul.f32 %v870, %v1097
        %v1108 = vmul.f32 %v873, %v1097
        %v1109 = vmul.f32 %v878, %v1097
        %v1110 = vmul.f32 %v881, %v1097
        %v1111 = vmul.f32 %v886, %v1097
        %v1112 = vmul.f32 %v889, %v1097
        %v1113 = vmul.f32 %v894, %v1097
        %v1114 = vmul.f32 %v897, %v1097
        %v1115 = vmul.f32 %v902, %v1097
        %v1116 = vmul.f32 %v905, %v1097
        %v1117 = vmul.f32 %v910, %v1097
        %v1118 = vmul.f32 %v913, %v1097
        %v1119 = vmul.f32 %v918, %v1097
        %v1120 = vmul.f32 %v921, %v1097
        %v1121 = vmul.f32 %v926, %v1097
        %v1122 = vmul.f32 %v929, %v1097
        %v1123 = vmul.f32 %v934, %v1097
        %v1124 = vmul.f32 %v937, %v1097
        %v1125 = vmul.f32 %v942, %v1097
        %v1126 = vmul.f32 %v945, %v1097
        %v1127 = vmul.f32 %v950, %v1097
        %v1128 = vmul.f32 %v953, %v1097
        %v1129 = vmul.f32 %v958, %v1097
        %v1130 = vmul.f32 %v961, %v1097
        %v1131 = vmul.f32 %v966, %v1097
        %v1132 = vmul.f32 %v969, %v1097
        %v1133 = vmul.f32 %v974, %v1097
        %v1134 = vmul.f32 %v977, %v1097
        %v1135 = vmul.f32 %v982, %v1097
        %v1136 = vmul.f32 %v985, %v1097
        %v1137 = vmul.f32 %v990, %v1097
        %v1138 = vmul.f32 %v993, %v1097
        %v1139 = vmul.f32 %v998, %v1097
        %v1140 = vmul.f32 %v1001, %v1097
        %v1141 = vmul.f32 %v1006, %v1097
        %v1142 = vmul.f32 %v1009, %v1097
        %v1143 = vmul.f32 %v1014, %v1097
        %v1144 = vmul.f32 %v1017, %v1097
        %v1145 = vmul.f32 %v1022, %v1097
        %v1146 = vmul.f32 %v1025, %v1097
        %v1147 = vmul.f32 %v1030, %v1097
        %v1148 = vmul.f32 %v1033, %v1097
        %v1149 = vmul.f32 %v1038, %v1097
        %v1150 = vmul.f32 %v1041, %v1097
        %v1151 = vmul.f32 %v1046, %v1097
        %v1152 = vmul.f32 %v1049, %v1097
        %v1153 = vmul.f32 %v1054, %v1097
        %v1154 = vmul.f32 %v1057, %v1097
        %v1155 = vmul.f32 %v1062, %v1097
        %v1156 = vmul.f32 %v1065, %v1097
        %v1157 = vmul.f32 %v1070, %v1097
        %v1158 = vmul.f32 %v1073, %v1097
        %v1159 = vmul.f32 %v1078, %v1097
        %v1160 = vmul.f32 %v1081, %v1097
        %v1161 = vmul.f32 %v1086, %v1097
        %v1162 = vmul.f32 %v1089, %v1097
        %v1163 = vld [vmem:[%s4] sm:$0x1]
        %v1165 = vlaneseq
        %v1166 = vshrl.u32 %v1165, 7
        %v1167 = vsub.s32 0, %v1166
        %v1168 = vrot.slane %v1163, %v1167
        %v1170 = vadd.f32 %v1099, %v1168
        %v1171 = vadd.f32 %v1100, %v1168
        %v1172 = vadd.f32 %v1101, %v1168
        %v1173 = vadd.f32 %v1102, %v1168
        %v1174 = vadd.f32 %v1103, %v1168
        %v1175 = vadd.f32 %v1104, %v1168
        %v1176 = vadd.f32 %v1105, %v1168
        %v1177 = vadd.f32 %v1106, %v1168
        %v1178 = vadd.f32 %v1107, %v1168
        %v1179 = vadd.f32 %v1108, %v1168
        %v1180 = vadd.f32 %v1109, %v1168
        %v1181 = vadd.f32 %v1110, %v1168
        %v1182 = vadd.f32 %v1111, %v1168
        %v1183 = vadd.f32 %v1112, %v1168
        %v1184 = vadd.f32 %v1113, %v1168
        %v1185 = vadd.f32 %v1114, %v1168
        %v1186 = vadd.f32 %v1115, %v1168
        %v1187 = vadd.f32 %v1116, %v1168
        %v1188 = vadd.f32 %v1117, %v1168
        %v1189 = vadd.f32 %v1118, %v1168
        %v1190 = vadd.f32 %v1119, %v1168
        %v1191 = vadd.f32 %v1120, %v1168
        %v1192 = vadd.f32 %v1121, %v1168
        %v1193 = vadd.f32 %v1122, %v1168
        %v1194 = vadd.f32 %v1123, %v1168
        %v1195 = vadd.f32 %v1124, %v1168
        %v1196 = vadd.f32 %v1125, %v1168
        %v1197 = vadd.f32 %v1126, %v1168
        %v1198 = vadd.f32 %v1127, %v1168
        %v1199 = vadd.f32 %v1128, %v1168
        %v1200 = vadd.f32 %v1129, %v1168
        %v1201 = vadd.f32 %v1130, %v1168
        %v1202 = vadd.f32 %v1131, %v1168
        %v1203 = vadd.f32 %v1132, %v1168
        %v1204 = vadd.f32 %v1133, %v1168
        %v1205 = vadd.f32 %v1134, %v1168
        %v1206 = vadd.f32 %v1135, %v1168
        %v1207 = vadd.f32 %v1136, %v1168
        %v1208 = vadd.f32 %v1137, %v1168
        %v1209 = vadd.f32 %v1138, %v1168
        %v1210 = vadd.f32 %v1139, %v1168
        %v1211 = vadd.f32 %v1140, %v1168
        %v1212 = vadd.f32 %v1141, %v1168
        %v1213 = vadd.f32 %v1142, %v1168
        %v1214 = vadd.f32 %v1143, %v1168
        %v1215 = vadd.f32 %v1144, %v1168
        %v1216 = vadd.f32 %v1145, %v1168
        %v1217 = vadd.f32 %v1146, %v1168
        %v1218 = vadd.f32 %v1147, %v1168
        %v1219 = vadd.f32 %v1148, %v1168
        %v1220 = vadd.f32 %v1149, %v1168
        %v1221 = vadd.f32 %v1150, %v1168
        %v1222 = vadd.f32 %v1151, %v1168
        %v1223 = vadd.f32 %v1152, %v1168
        %v1224 = vadd.f32 %v1153, %v1168
        %v1225 = vadd.f32 %v1154, %v1168
        %v1226 = vadd.f32 %v1155, %v1168
        %v1227 = vadd.f32 %v1156, %v1168
        %v1228 = vadd.f32 %v1157, %v1168
        %v1229 = vadd.f32 %v1158, %v1168
        %v1230 = vadd.f32 %v1159, %v1168
        %v1231 = vadd.f32 %v1160, %v1168
        %v1232 = vadd.f32 %v1161, %v1168
        %v1233 = vadd.f32 %v1162, %v1168
        %v1234 = vmax.f32 %v1170, 0.0
        %v1235 = vmax.f32 %v1171, 0.0
        %v1236 = vmax.f32 %v1172, 0.0
        %v1237 = vmax.f32 %v1173, 0.0
        %v1238 = vmax.f32 %v1174, 0.0
        %v1239 = vmax.f32 %v1175, 0.0
        %v1240 = vmax.f32 %v1176, 0.0
        %v1241 = vmax.f32 %v1177, 0.0
        %v1242 = vmax.f32 %v1178, 0.0
        %v1243 = vmax.f32 %v1179, 0.0
        %v1244 = vmax.f32 %v1180, 0.0
        %v1245 = vmax.f32 %v1181, 0.0
        %v1246 = vmax.f32 %v1182, 0.0
        %v1247 = vmax.f32 %v1183, 0.0
        %v1248 = vmax.f32 %v1184, 0.0
        %v1249 = vmax.f32 %v1185, 0.0
        %v1250 = vmax.f32 %v1186, 0.0
        %v1251 = vmax.f32 %v1187, 0.0
        %v1252 = vmax.f32 %v1188, 0.0
        %v1253 = vmax.f32 %v1189, 0.0
        %v1254 = vmax.f32 %v1190, 0.0
        %v1255 = vmax.f32 %v1191, 0.0
        %v1256 = vmax.f32 %v1192, 0.0
        %v1257 = vmax.f32 %v1193, 0.0
        %v1258 = vmax.f32 %v1194, 0.0
        %v1259 = vmax.f32 %v1195, 0.0
        %v1260 = vmax.f32 %v1196, 0.0
        %v1261 = vmax.f32 %v1197, 0.0
        %v1262 = vmax.f32 %v1198, 0.0
        %v1263 = vmax.f32 %v1199, 0.0
        %v1264 = vmax.f32 %v1200, 0.0
        %v1265 = vmax.f32 %v1201, 0.0
        %v1266 = vmax.f32 %v1202, 0.0
        %v1267 = vmax.f32 %v1203, 0.0
        %v1268 = vmax.f32 %v1204, 0.0
        %v1269 = vmax.f32 %v1205, 0.0
        %v1270 = vmax.f32 %v1206, 0.0
        %v1271 = vmax.f32 %v1207, 0.0
        %v1272 = vmax.f32 %v1208, 0.0
        %v1273 = vmax.f32 %v1209, 0.0
        %v1274 = vmax.f32 %v1210, 0.0
        %v1275 = vmax.f32 %v1211, 0.0
        %v1276 = vmax.f32 %v1212, 0.0
        %v1277 = vmax.f32 %v1213, 0.0
        %v1278 = vmax.f32 %v1214, 0.0
        %v1279 = vmax.f32 %v1215, 0.0
        %v1280 = vmax.f32 %v1216, 0.0
        %v1281 = vmax.f32 %v1217, 0.0
        %v1282 = vmax.f32 %v1218, 0.0
        %v1283 = vmax.f32 %v1219, 0.0
        %v1284 = vmax.f32 %v1220, 0.0
        %v1285 = vmax.f32 %v1221, 0.0
        %v1286 = vmax.f32 %v1222, 0.0
        %v1287 = vmax.f32 %v1223, 0.0
        %v1288 = vmax.f32 %v1224, 0.0
        %v1289 = vmax.f32 %v1225, 0.0
        %v1290 = vmax.f32 %v1226, 0.0
        %v1291 = vmax.f32 %v1227, 0.0
        %v1292 = vmax.f32 %v1228, 0.0
        %v1293 = vmax.f32 %v1229, 0.0
        %v1294 = vmax.f32 %v1230, 0.0
        %v1295 = vmax.f32 %v1231, 0.0
        %v1296 = vmax.f32 %v1232, 0.0
        %v1297 = vmax.f32 %v1233, 0.0
        %v1298 = vld [vmem:[#allocation2] sm:$0xff]
        %v1299 = vadd.f32 %v1234, %v1235
        %v1300 = vadd.f32 %v1299, %v1236
        %v1301 = vadd.f32 %v1300, %v1237
        %v1302 = vadd.f32 %v1301, %v1238
        %v1303 = vadd.f32 %v1302, %v1239
        %v1304 = vadd.f32 %v1303, %v1240
        %v1305 = vadd.f32 %v1304, %v1241
        %v1306 = vrot.slane %v1305, 4
        %v1307 = vadd.f32 %v1305, %v1306
        %v1308 = vrot.slane %v1307, 2
        %v1309 = vadd.f32 %v1307, %v1308
        %v1310 = vrot.slane %v1309, 1
        %v1311 = vadd.f32 %v1309, %v1310
        %v1312 = vadd.f32 %v1242, %v1243
        %v1313 = vadd.f32 %v1312, %v1244
        %v1314 = vadd.f32 %v1313, %v1245
        %v1315 = vadd.f32 %v1314, %v1246
        %v1316 = vadd.f32 %v1315, %v1247
        %v1317 = vadd.f32 %v1316, %v1248
        %v1318 = vadd.f32 %v1317, %v1249
        %v1319 = vrot.slane %v1318, 4
        %v1320 = vadd.f32 %v1318, %v1319
        %v1321 = vrot.slane %v1320, 2
        %v1322 = vadd.f32 %v1320, %v1321
        %v1323 = vrot.slane %v1322, 1
        %v1324 = vadd.f32 %v1322, %v1323
        %v1325 = vadd.f32 %v1250, %v1251
        %v1326 = vadd.f32 %v1325, %v1252
        %v1327 = vadd.f32 %v1326, %v1253
        %v1328 = vadd.f32 %v1327, %v1254
        %v1329 = vadd.f32 %v1328, %v1255
        %v1330 = vadd.f32 %v1329, %v1256
        %v1331 = vadd.f32 %v1330, %v1257
        %v1332 = vrot.slane %v1331, 4
        %v1333 = vadd.f32 %v1331, %v1332
        %v1334 = vrot.slane %v1333, 2
        %v1335 = vadd.f32 %v1333, %v1334
        %v1336 = vrot.slane %v1335, 1
        %v1337 = vadd.f32 %v1335, %v1336
        %v1338 = vadd.f32 %v1258, %v1259
        %v1339 = vadd.f32 %v1338, %v1260
        %v1340 = vadd.f32 %v1339, %v1261
        %v1341 = vadd.f32 %v1340, %v1262
        %v1342 = vadd.f32 %v1341, %v1263
        %v1343 = vadd.f32 %v1342, %v1264
        %v1344 = vadd.f32 %v1343, %v1265
        %v1345 = vrot.slane %v1344, 4
        %v1346 = vadd.f32 %v1344, %v1345
        %v1347 = vrot.slane %v1346, 2
        %v1348 = vadd.f32 %v1346, %v1347
        %v1349 = vrot.slane %v1348, 1
        %v1350 = vadd.f32 %v1348, %v1349
        %v1351 = vadd.f32 %v1266, %v1267
        %v1352 = vadd.f32 %v1351, %v1268
        %v1353 = vadd.f32 %v1352, %v1269
        %v1354 = vadd.f32 %v1353, %v1270
        %v1355 = vadd.f32 %v1354, %v1271
        %v1356 = vadd.f32 %v1355, %v1272
        %v1357 = vadd.f32 %v1356, %v1273
        %v1358 = vrot.slane %v1357, 4
        %v1359 = vadd.f32 %v1357, %v1358
        %v1360 = vrot.slane %v1359, 2
        %v1361 = vadd.f32 %v1359, %v1360
        %v1362 = vrot.slane %v1361, 1
        %v1363 = vadd.f32 %v1361, %v1362
        %v1364 = vadd.f32 %v1274, %v1275
        %v1365 = vadd.f32 %v1364, %v1276
        %v1366 = vadd.f32 %v1365, %v1277
        %v1367 = vadd.f32 %v1366, %v1278
        %v1368 = vadd.f32 %v1367, %v1279
        %v1369 = vadd.f32 %v1368, %v1280
        %v1370 = vadd.f32 %v1369, %v1281
        %v1371 = vrot.slane %v1370, 4
        %v1372 = vadd.f32 %v1370, %v1371
        %v1373 = vrot.slane %v1372, 2
        %v1374 = vadd.f32 %v1372, %v1373
        %v1375 = vrot.slane %v1374, 1
        %v1376 = vadd.f32 %v1374, %v1375
        %v1377 = vadd.f32 %v1282, %v1283
        %v1378 = vadd.f32 %v1377, %v1284
        %v1379 = vadd.f32 %v1378, %v1285
        %v1380 = vadd.f32 %v1379, %v1286
        %v1381 = vadd.f32 %v1380, %v1287
        %v1382 = vadd.f32 %v1381, %v1288
        %v1383 = vadd.f32 %v1382, %v1289
        %v1384 = vrot.slane %v1383, 4
        %v1385 = vadd.f32 %v1383, %v1384
        %v1386 = vrot.slane %v1385, 2
        %v1387 = vadd.f32 %v1385, %v1386
        %v1388 = vrot.slane %v1387, 1
        %v1389 = vadd.f32 %v1387, %v1388
        %v1390 = vadd.f32 %v1290, %v1291
        %v1391 = vadd.f32 %v1390, %v1292
        %v1392 = vadd.f32 %v1391, %v1293
        %v1393 = vadd.f32 %v1392, %v1294
        %v1394 = vadd.f32 %v1393, %v1295
        %v1395 = vadd.f32 %v1394, %v1296
        %v1396 = vadd.f32 %v1395, %v1297
        %v1397 = vrot.slane %v1396, 4
        %v1398 = vadd.f32 %v1396, %v1397
        %v1399 = vrot.slane %v1398, 2
        %v1400 = vadd.f32 %v1398, %v1399
        %v1401 = vrot.slane %v1400, 1
        %v1402 = vadd.f32 %v1400, %v1401
        %vm1411 = vcmask 1041409
        %v1412 = vsel %vm1411, %v1324, %v1311
        %vm1413 = vcmask 1042434
        %v1414 = vsel %vm1413, %v1337, %v1412
        %vm1415 = vcmask 1043459
        %v1416 = vsel %vm1415, %v1350, %v1414
        %vm1417 = vcmask 1044484
        %v1418 = vsel %vm1417, %v1363, %v1416
        %vm1419 = vcmask 1045509
        %v1420 = vsel %vm1419, %v1376, %v1418
        %vm1421 = vcmask 1046534
        %v1422 = vsel %vm1421, %v1389, %v1420
        %vm1423 = vcmask 1047559
        %v1424 = vsel %vm1423, %v1402, %v1422
        %v1426 = vadd.f32 %v1298, %v1424
        %1427 = vst [vmem:[#allocation2] sm:$0xff] %v1426
        // Predicated region
        $region53: #{tpu_custom_call.1} parent=39 // pred_check
          %p1428 = pneg %p279
        $region54: #{tpu_custom_call.1} parent=39 // pred_check_branch
          %1430 = sbr.rel (%p1428) target = $region56
        $region55: #{tpu_custom_call.1} parent=39 // pred_region
          %v1431 = vld [vmem:[#allocation2] sm:$0xff]
          %v1432 = vmul.f32 %v1431, 0.015625
          %1433 = vst [vmem:[%s275] sm:$0xff] %v1432
        $region56: #{tpu_custom_call.1} parent=39 // pred_fallthru
          _
        %s1434 = sand.u32 %s155, 1
        %s1435 = scalar_lea.sflag [#allocation5], %s1434
        %s1436 = sand.u32 %s155, 1
        %s1437 = smul.addr %s1436, 8
        %s1438 = scalar_lea.vmem [#allocation8], %s1437
        // Predicated region
        $region57: #{tpu_custom_call.1} parent=39 // pred_check
          %p1439 = pneg %p165
        $region58: #{tpu_custom_call.1} parent=39 // pred_check_branch
          %1441 = sbr.rel (%p1439) target = $region60
        $region59: #{tpu_custom_call.1} parent=39 // pred_region
          %s1443 = ssub.s32 128, 128
          %1444 = vsyncadd %s1435, %s1443
          %s1445 = smul.addr %s27, 128
          %s1446 = scalar_lea.hbm %s5, %s1445
          %s1448 = sshll.u32 %s1438, 4
          %s1449 = int_to_ptr.vmem [resolvable:$true] %s1448
          %1451 = dma.vmem_to_hbm [thread:$0]  %s1449, 128, %s1446, %s1435
        $region60: #{tpu_custom_call.1} parent=39 // pred_fallthru
          _
      $region40: #{tpu_custom_call.1} parent=5 // pred_fallthru
        _
      %p1452 = scmp.le.s32.totalorder 2, %s18
      // Predicated region
      $region61: #{tpu_custom_call.1} parent=5 // pred_check
        %p1453 = pneg %p1452
      $region62: #{tpu_custom_call.1} parent=5 // pred_check_branch
        %1455 = sbr.rel (%p1453) target = $region64
      $region63: #{tpu_custom_call.1} parent=5 // pred_region
        %s1456 = ssub.s32 %s18, 2
        // Predicated region
        $region65: #{tpu_custom_call.1} parent=63 // pred_check
          %p1457 = pneg %p171
        $region66: #{tpu_custom_call.1} parent=63 // pred_check_branch
          %1459 = sbr.rel (%p1457) target = $region68
        $region67: #{tpu_custom_call.1} parent=63 // pred_region
          %s1460 = sand.u32 %s156, 1
          %s1461 = scalar_lea.sflag [#allocation5], %s1460
          %s1462 = sand.u32 %s156, 1
          %s1463 = smul.addr %s1462, 8
          %s1464 = scalar_lea.vmem [#allocation8], %s1463
          %1465 = dma.done %s1461, 128
        $region68: #{tpu_custom_call.1} parent=63 // pred_fallthru
          _
      $region64: #{tpu_custom_call.1} parent=5 // pred_fallthru
        _
    $region6: #{tpu_custom_call.1} parent=1 // loop_footer
      %s22 = sadd.s32 1, %s18
    $region7: #{tpu_custom_call.1} parent=1 // loop_footer_branch
      %17 = sbr.rel target = $region3
    $region8: #{tpu_custom_call.1} parent=1 // loop_exit
      _
    %1466 = vsyncpa [#allocation4], 1
    %s1467 = scalar_lea.sflag [#allocation4], 1
    %1468 = vsyncpa %s1467, 1
    %1469 = vsyncpa [#allocation7], 1
    %1470 = vsyncpa [#allocation5], 1
    %s1471 = scalar_lea.sflag [#allocation5], 1
    %1472 = vsyncpa %s1471, 1

</llo_original>
